<compile_context>
chip_gen: v5e
topology: v5e:2x2
jax: 0.10.0
libtpu: 0.0.40
codegen_flags: <defaults>
</compile_context>

<pallas_src>
import jax
import jax.numpy as jnp
from jax.experimental import pallas as pl
from jax.experimental.pallas import tpu as pltpu

DEPTH = 13            # 1 input + 11 hidden + 1 output linear layers
WIDTH = 50
IN_FEATURES = 14
OUT_FEATURES = 2
NEG_SLOPE = 0.01      # nn.LeakyReLU default
N_HIDDEN = DEPTH - 2

LANE = 128            # TPU lane width; hidden dim padded to this
IN_PAD = 16           # 14 real features + 1 constant-one column + 1 zero
ONE_COL = IN_FEATURES # column of x that holds the constant 1 (bias carry)
CARRY = LANE - 1      # hidden lane that carries the constant 1 forward
OUT_PAD = 8           # 2 real outputs padded to 8 lanes (narrow writeback)


def _leaky_relu(x):
    # max(x, a*x) == leaky_relu(x) for 0 < a < 1; works in f32 or bf16.
    return jnp.maximum(x, NEG_SLOPE * x)


def _round_up(n, m):
    return ((n + m - 1) // m) * m


def _make_kernel(acc_dtype):
    """acc_dtype: matmul-result / LeakyReLU dtype for input+hidden layers
    (bf16 on chips with a bf16 VPU, f32 otherwise)."""

    def mlp_kernel(x_ref, w_in_ref, w_hid_ref, w_out_ref, o_ref):
        # x_ref: (tb, 16) f32, column 14 == 1.0 (feeds the folded biases).
        # Weights are bf16 with biases folded into padding rows (pack_params).
        x = x_ref[...].astype(jnp.bfloat16)

        # input layer: (tb,16) @ (16,128); lane 127 becomes the constant 1.
        h = jnp.dot(x, w_in_ref[...], preferred_element_type=acc_dtype)
        h = _leaky_relu(h).astype(jnp.bfloat16)

        # hidden layers, static unroll over 11 stacked (128,128) weights.
        for i in range(N_HIDDEN):
            h = jnp.dot(h, w_hid_ref[i], preferred_element_type=acc_dtype)
            h = _leaky_relu(h).astype(jnp.bfloat16)

        # output layer: (tb,128) @ (128,8); f32 accumulation, narrow store.
        out = jnp.dot(h, w_out_ref[...], preferred_element_type=jnp.float32)
        o_ref[...] = out.astype(o_ref.dtype)

    return mlp_kernel


def pack_params(params):
    """Lane-pad weights to kernel layout, fold biases in, cast to bf16.

    Homogeneous-coordinate bias trick:
      * x gets a constant-1 column at index 14 (done in mlp_forward).
      * w_in  (16, 128):  [0:14, 0:50] real, row 14 = b_in, w_in[14,127] = 1
        so lane 127 of every activation carries the constant 1.
      * w_hid (11,128,128): [0:50, 0:50] real, row 127 = b_hid,
        [127, 127] = 1 to keep the carry alive (LeakyReLU(1) == 1).
      * w_out (128, 8):   [0:50, 0:2] real, row 127 = b_out.
    """
    w_in = jnp.zeros((IN_PAD, LANE), jnp.float32)
    w_in = w_in.at[:IN_FEATURES, :WIDTH].set(params["w_in"])
    w_in = w_in.at[ONE_COL, :WIDTH].set(params["b_in"][0])
    w_in = w_in.at[ONE_COL, CARRY].set(1.0)

    w_hid = jnp.zeros((N_HIDDEN, LANE, LANE), jnp.float32)
    w_hid = w_hid.at[:, :WIDTH, :WIDTH].set(params["w_hid"])
    w_hid = w_hid.at[:, CARRY, :WIDTH].set(params["b_hid"][:, 0, :])
    w_hid = w_hid.at[:, CARRY, CARRY].set(1.0)

    w_out = jnp.zeros((LANE, OUT_PAD), jnp.float32)
    w_out = w_out.at[:WIDTH, :OUT_FEATURES].set(params["w_out"])
    w_out = w_out.at[CARRY, :OUT_FEATURES].set(params["b_out"][0])

    return {
        "w_in": w_in.astype(jnp.bfloat16),
        "w_hid": w_hid.astype(jnp.bfloat16),
        "w_out": w_out.astype(jnp.bfloat16),
    }


def _has_bf16_vpu():
    """bf16 epilogue only on chips with a bf16 VPU (v6e / v7x)."""
    try:
        kind = jax.devices()[0].device_kind.lower()
    except Exception:
        return False
    return any(tag in kind for tag in ("v6", "v7", "tpu7"))


def _choose_tile(B, tb):
    """Batch tile: multiple of 8, <= requested tb, and small enough that the
    grid has >= 2 steps when the batch allows it (v7x megacore sharding)."""
    b8 = _round_up(B, 8)
    cap = _round_up(b8 // 2, 8) if b8 >= 16 else b8
    return max(8, min(_round_up(tb, 8), b8, cap))


def mlp_forward(x, packed, *, tb=1024, bf16_epilogue=None):
    """x: (B, 14) float32; packed: pack_params() output. Returns (B, 2) f32.

    VMEM/step at tb=1024: ~0.36 MiB weights (x2 buffers), ~0.1 MiB x/out
    tiles, <1 MiB live activations -> far under the 32 MiB scoped default on
    every generation (incl. v7x's 64 MiB physical VMEM); no override needed.
    """
    if bf16_epilogue is None:
        bf16_epilogue = _has_bf16_vpu()
    acc_dtype = jnp.bfloat16 if bf16_epilogue else jnp.float32

    B = x.shape[0]
    tb_eff = _choose_tile(B, tb)
    B_pad = _round_up(B, tb_eff)

    # Augment x: pad rows to B_pad, pad features to 16 with a constant-1
    # column at index 14 that feeds the folded biases.
    x_aug = jnp.zeros((B_pad, IN_PAD), jnp.float32)
    x_aug = x_aug.at[:B, :IN_FEATURES].set(x.astype(jnp.float32))
    x_aug = x_aug.at[:, ONE_COL].set(1.0)

    grid = (B_pad // tb_eff,)

    out = pl.pallas_call(
        _make_kernel(acc_dtype),
        out_shape=jax.ShapeDtypeStruct((B_pad, OUT_PAD), jnp.float32),
        grid_spec=pltpu.PrefetchScalarGridSpec(
            num_scalar_prefetch=0,
            grid=grid,
            in_specs=[
                pl.BlockSpec((tb_eff, IN_PAD), lambda i: (i, 0)),           # x
                pl.BlockSpec((IN_PAD, LANE), lambda i: (0, 0)),             # w_in
                pl.BlockSpec((N_HIDDEN, LANE, LANE), lambda i: (0, 0, 0)),  # w_hid
                pl.BlockSpec((LANE, OUT_PAD), lambda i: (0, 0)),            # w_out
            ],
            out_specs=pl.BlockSpec((tb_eff, OUT_PAD), lambda i: (i, 0)),
        ),
        compiler_params=pltpu.CompilerParams(
            dimension_semantics=("parallel",)),
    )(x_aug, packed["w_in"], packed["w_hid"], packed["w_out"])

    return out[:B, :OUT_FEATURES]


def init_params(key):
    """Deterministic init mimicking PyTorch Linear's U(-1/sqrt(fan_in), +)."""
    ks = jax.random.split(key, 6)

    def uniform(k, shape, fan_in):
        bound = 1.0 / jnp.sqrt(jnp.float32(fan_in))
        return jax.random.uniform(k, shape, jnp.float32, -bound, bound)

    return {
        "w_in": uniform(ks[0], (IN_FEATURES, WIDTH), IN_FEATURES),
        "b_in": uniform(ks[1], (1, WIDTH), IN_FEATURES),
        "w_hid": uniform(ks[2], (N_HIDDEN, WIDTH, WIDTH), WIDTH),
        "b_hid": uniform(ks[3], (N_HIDDEN, 1, WIDTH), WIDTH),
        "w_out": uniform(ks[4], (WIDTH, OUT_FEATURES), WIDTH),
        "b_out": uniform(ks[5], (1, OUT_FEATURES), WIDTH),
    }


def reference_forward(x, params):
    """Module semantics with bf16 matmul inputs / f32 accumulation+bias."""
    def dot(a, b):
        return jnp.dot(a.astype(jnp.bfloat16), b.astype(jnp.bfloat16),
                       preferred_element_type=jnp.float32)

    h = _leaky_relu(dot(x, params["w_in"]) + params["b_in"])
    for i in range(N_HIDDEN):
        h = _leaky_relu(dot(h, params["w_hid"][i]) + params["b_hid"][i])
    return dot(h, params["w_out"]) + params["b_out"]


if __name__ == "__main__":
    key = jax.random.PRNGKey(0)
    k_x, k_p = jax.random.split(key)

    # B=250: not a multiple of the tile (exercises row padding) and large
    # enough that _choose_tile yields a 2-step parallel grid (tb_eff=128).
    B = 250
    x = jax.random.normal(k_x, (B, IN_FEATURES), jnp.float32)
    params = init_params(k_p)
    packed = pack_params(params)

    out = mlp_forward(x, packed)
    out = jax.block_until_ready(out)

    ref = reference_forward(x, params)
    assert out.shape == (B, OUT_FEATURES)
    # Tolerance covers 13 chained bf16 matmuls plus bf16-folded biases.
    assert jnp.allclose(out, ref, atol=2e-2, rtol=2e-2), "mismatch vs. reference"

    print("KERNEL_OK")
</pallas_src>

<mosaic_0001>
module attributes {stable_mosaic.version = 11 : i64} {
  func.func @mlp_kernel(%arg0: i32, %arg1: memref<128x16xf32, #tpu.memory_space<vmem>>, %arg2: memref<16x128xbf16, #tpu.memory_space<vmem>>, %arg3: memref<11x128x128xbf16, #tpu.memory_space<vmem>>, %arg4: memref<128x8xbf16, #tpu.memory_space<vmem>>, %arg5: memref<128x8xf32, #tpu.memory_space<vmem>>) attributes {dimension_semantics = [#tpu.dimension_semantics<parallel>], iteration_bounds = array<i64: 2>, scalar_prefetch = 0 : i64, scratch_operands = 0 : i64, tpu.core_type = #tpu.core_type<tc>, window_params = [{transform_indices = @transform_0, window_bounds = array<i64: 128, 16>}, {pipeline_mode = #tpu.pipeline_mode<synchronous>, transform_indices = @transform_1, window_bounds = array<i64: 16, 128>}, {pipeline_mode = #tpu.pipeline_mode<synchronous>, transform_indices = @transform_2, window_bounds = array<i64: 11, 128, 128>}, {pipeline_mode = #tpu.pipeline_mode<synchronous>, transform_indices = @transform_3, window_bounds = array<i64: 128, 8>}, {transform_indices = @transform_4, window_bounds = array<i64: 128, 8>}]} {
    %c0 = arith.constant 0 : index
    %c0_0 = arith.constant 0 : index
    %0 = vector.load %arg1[%c0, %c0_0] : memref<128x16xf32, #tpu.memory_space<vmem>>, vector<128x16xf32>
    %1 = arith.truncf %0 : vector<128x16xf32> to vector<128x16xbf16>
    %c0_1 = arith.constant 0 : index
    %c0_2 = arith.constant 0 : index
    %2 = vector.load %arg2[%c0_1, %c0_2] : memref<16x128xbf16, #tpu.memory_space<vmem>>, vector<16x128xbf16>
    %cst = arith.constant dense<0.000000e+00> : vector<128x128xf32>
    %3 = tpu.matmul %1, %2, %cst {dimension_numbers = #tpu.dot_dimension_numbers<[1], [0], [0], [1], [0, 0, 1, 1], [], []>} : vector<128x16xbf16>, vector<16x128xbf16>, vector<128x128xf32> -> vector<128x128xf32>
    %cst_3 = arith.constant 0.00999999977 : f32
    %4 = vector.broadcast %cst_3 : f32 to vector<128x128xf32>
    %5 = arith.mulf %4, %3 : vector<128x128xf32>
    %6 = arith.maximumf %3, %5 : vector<128x128xf32>
    %7 = arith.truncf %6 : vector<128x128xf32> to vector<128x128xbf16>
    %c0_4 = arith.constant 0 : index
    %c0_5 = arith.constant 0 : index
    %c0_6 = arith.constant 0 : index
    %8 = vector.load %arg3[%c0_4, %c0_5, %c0_6] : memref<11x128x128xbf16, #tpu.memory_space<vmem>>, vector<1x128x128xbf16>
    %9 = vector.shape_cast %8 : vector<1x128x128xbf16> to vector<128x128xbf16>
    %cst_7 = arith.constant dense<0.000000e+00> : vector<128x128xf32>
    %10 = tpu.matmul %7, %9, %cst_7 {dimension_numbers = #tpu.dot_dimension_numbers<[1], [0], [0], [1], [0, 0, 1, 1], [], []>} : vector<128x128xbf16>, vector<128x128xbf16>, vector<128x128xf32> -> vector<128x128xf32>
    %cst_8 = arith.constant 0.00999999977 : f32
    %11 = vector.broadcast %cst_8 : f32 to vector<128x128xf32>
    %12 = arith.mulf %11, %10 : vector<128x128xf32>
    %13 = arith.maximumf %10, %12 : vector<128x128xf32>
    %14 = arith.truncf %13 : vector<128x128xf32> to vector<128x128xbf16>
    %c1 = arith.constant 1 : index
    %c0_9 = arith.constant 0 : index
    %c0_10 = arith.constant 0 : index
    %15 = vector.load %arg3[%c1, %c0_9, %c0_10] : memref<11x128x128xbf16, #tpu.memory_space<vmem>>, vector<1x128x128xbf16>
    %16 = vector.shape_cast %15 : vector<1x128x128xbf16> to vector<128x128xbf16>
    %cst_11 = arith.constant dense<0.000000e+00> : vector<128x128xf32>
    %17 = tpu.matmul %14, %16, %cst_11 {dimension_numbers = #tpu.dot_dimension_numbers<[1], [0], [0], [1], [0, 0, 1, 1], [], []>} : vector<128x128xbf16>, vector<128x128xbf16>, vector<128x128xf32> -> vector<128x128xf32>
    %cst_12 = arith.constant 0.00999999977 : f32
    %18 = vector.broadcast %cst_12 : f32 to vector<128x128xf32>
    %19 = arith.mulf %18, %17 : vector<128x128xf32>
    %20 = arith.maximumf %17, %19 : vector<128x128xf32>
    %21 = arith.truncf %20 : vector<128x128xf32> to vector<128x128xbf16>
    %c2 = arith.constant 2 : index
    %c0_13 = arith.constant 0 : index
    %c0_14 = arith.constant 0 : index
    %22 = vector.load %arg3[%c2, %c0_13, %c0_14] : memref<11x128x128xbf16, #tpu.memory_space<vmem>>, vector<1x128x128xbf16>
    %23 = vector.shape_cast %22 : vector<1x128x128xbf16> to vector<128x128xbf16>
    %cst_15 = arith.constant dense<0.000000e+00> : vector<128x128xf32>
    %24 = tpu.matmul %21, %23, %cst_15 {dimension_numbers = #tpu.dot_dimension_numbers<[1], [0], [0], [1], [0, 0, 1, 1], [], []>} : vector<128x128xbf16>, vector<128x128xbf16>, vector<128x128xf32> -> vector<128x128xf32>
    %cst_16 = arith.constant 0.00999999977 : f32
    %25 = vector.broadcast %cst_16 : f32 to vector<128x128xf32>
    %26 = arith.mulf %25, %24 : vector<128x128xf32>
    %27 = arith.maximumf %24, %26 : vector<128x128xf32>
    %28 = arith.truncf %27 : vector<128x128xf32> to vector<128x128xbf16>
    %c3 = arith.constant 3 : index
    %c0_17 = arith.constant 0 : index
    %c0_18 = arith.constant 0 : index
    %29 = vector.load %arg3[%c3, %c0_17, %c0_18] : memref<11x128x128xbf16, #tpu.memory_space<vmem>>, vector<1x128x128xbf16>
    %30 = vector.shape_cast %29 : vector<1x128x128xbf16> to vector<128x128xbf16>
    %cst_19 = arith.constant dense<0.000000e+00> : vector<128x128xf32>
    %31 = tpu.matmul %28, %30, %cst_19 {dimension_numbers = #tpu.dot_dimension_numbers<[1], [0], [0], [1], [0, 0, 1, 1], [], []>} : vector<128x128xbf16>, vector<128x128xbf16>, vector<128x128xf32> -> vector<128x128xf32>
    %cst_20 = arith.constant 0.00999999977 : f32
    %32 = vector.broadcast %cst_20 : f32 to vector<128x128xf32>
    %33 = arith.mulf %32, %31 : vector<128x128xf32>
    %34 = arith.maximumf %31, %33 : vector<128x128xf32>
    %35 = arith.truncf %34 : vector<128x128xf32> to vector<128x128xbf16>
    %c4 = arith.constant 4 : index
    %c0_21 = arith.constant 0 : index
    %c0_22 = arith.constant 0 : index
    %36 = vector.load %arg3[%c4, %c0_21, %c0_22] : memref<11x128x128xbf16, #tpu.memory_space<vmem>>, vector<1x128x128xbf16>
    %37 = vector.shape_cast %36 : vector<1x128x128xbf16> to vector<128x128xbf16>
    %cst_23 = arith.constant dense<0.000000e+00> : vector<128x128xf32>
    %38 = tpu.matmul %35, %37, %cst_23 {dimension_numbers = #tpu.dot_dimension_numbers<[1], [0], [0], [1], [0, 0, 1, 1], [], []>} : vector<128x128xbf16>, vector<128x128xbf16>, vector<128x128xf32> -> vector<128x128xf32>
    %cst_24 = arith.constant 0.00999999977 : f32
    %39 = vector.broadcast %cst_24 : f32 to vector<128x128xf32>
    %40 = arith.mulf %39, %38 : vector<128x128xf32>
    %41 = arith.maximumf %38, %40 : vector<128x128xf32>
    %42 = arith.truncf %41 : vector<128x128xf32> to vector<128x128xbf16>
    %c5 = arith.constant 5 : index
    %c0_25 = arith.constant 0 : index
    %c0_26 = arith.constant 0 : index
    %43 = vector.load %arg3[%c5, %c0_25, %c0_26] : memref<11x128x128xbf16, #tpu.memory_space<vmem>>, vector<1x128x128xbf16>
    %44 = vector.shape_cast %43 : vector<1x128x128xbf16> to vector<128x128xbf16>
    %cst_27 = arith.constant dense<0.000000e+00> : vector<128x128xf32>
    %45 = tpu.matmul %42, %44, %cst_27 {dimension_numbers = #tpu.dot_dimension_numbers<[1], [0], [0], [1], [0, 0, 1, 1], [], []>} : vector<128x128xbf16>, vector<128x128xbf16>, vector<128x128xf32> -> vector<128x128xf32>
    %cst_28 = arith.constant 0.00999999977 : f32
    %46 = vector.broadcast %cst_28 : f32 to vector<128x128xf32>
    %47 = arith.mulf %46, %45 : vector<128x128xf32>
    %48 = arith.maximumf %45, %47 : vector<128x128xf32>
    %49 = arith.truncf %48 : vector<128x128xf32> to vector<128x128xbf16>
    %c6 = arith.constant 6 : index
    %c0_29 = arith.constant 0 : index
    %c0_30 = arith.constant 0 : index
    %50 = vector.load %arg3[%c6, %c0_29, %c0_30] : memref<11x128x128xbf16, #tpu.memory_space<vmem>>, vector<1x128x128xbf16>
    %51 = vector.shape_cast %50 : vector<1x128x128xbf16> to vector<128x128xbf16>
    %cst_31 = arith.constant dense<0.000000e+00> : vector<128x128xf32>
    %52 = tpu.matmul %49, %51, %cst_31 {dimension_numbers = #tpu.dot_dimension_numbers<[1], [0], [0], [1], [0, 0, 1, 1], [], []>} : vector<128x128xbf16>, vector<128x128xbf16>, vector<128x128xf32> -> vector<128x128xf32>
    %cst_32 = arith.constant 0.00999999977 : f32
    %53 = vector.broadcast %cst_32 : f32 to vector<128x128xf32>
    %54 = arith.mulf %53, %52 : vector<128x128xf32>
    %55 = arith.maximumf %52, %54 : vector<128x128xf32>
    %56 = arith.truncf %55 : vector<128x128xf32> to vector<128x128xbf16>
    %c7 = arith.constant 7 : index
    %c0_33 = arith.constant 0 : index
    %c0_34 = arith.constant 0 : index
    %57 = vector.load %arg3[%c7, %c0_33, %c0_34] : memref<11x128x128xbf16, #tpu.memory_space<vmem>>, vector<1x128x128xbf16>
    %58 = vector.shape_cast %57 : vector<1x128x128xbf16> to vector<128x128xbf16>
    %cst_35 = arith.constant dense<0.000000e+00> : vector<128x128xf32>
    %59 = tpu.matmul %56, %58, %cst_35 {dimension_numbers = #tpu.dot_dimension_numbers<[1], [0], [0], [1], [0, 0, 1, 1], [], []>} : vector<128x128xbf16>, vector<128x128xbf16>, vector<128x128xf32> -> vector<128x128xf32>
    %cst_36 = arith.constant 0.00999999977 : f32
    %60 = vector.broadcast %cst_36 : f32 to vector<128x128xf32>
    %61 = arith.mulf %60, %59 : vector<128x128xf32>
    %62 = arith.maximumf %59, %61 : vector<128x128xf32>
    %63 = arith.truncf %62 : vector<128x128xf32> to vector<128x128xbf16>
    %c8 = arith.constant 8 : index
    %c0_37 = arith.constant 0 : index
    %c0_38 = arith.constant 0 : index
    %64 = vector.load %arg3[%c8, %c0_37, %c0_38] : memref<11x128x128xbf16, #tpu.memory_space<vmem>>, vector<1x128x128xbf16>
    %65 = vector.shape_cast %64 : vector<1x128x128xbf16> to vector<128x128xbf16>
    %cst_39 = arith.constant dense<0.000000e+00> : vector<128x128xf32>
    %66 = tpu.matmul %63, %65, %cst_39 {dimension_numbers = #tpu.dot_dimension_numbers<[1], [0], [0], [1], [0, 0, 1, 1], [], []>} : vector<128x128xbf16>, vector<128x128xbf16>, vector<128x128xf32> -> vector<128x128xf32>
    %cst_40 = arith.constant 0.00999999977 : f32
    %67 = vector.broadcast %cst_40 : f32 to vector<128x128xf32>
    %68 = arith.mulf %67, %66 : vector<128x128xf32>
    %69 = arith.maximumf %66, %68 : vector<128x128xf32>
    %70 = arith.truncf %69 : vector<128x128xf32> to vector<128x128xbf16>
    %c9 = arith.constant 9 : index
    %c0_41 = arith.constant 0 : index
    %c0_42 = arith.constant 0 : index
    %71 = vector.load %arg3[%c9, %c0_41, %c0_42] : memref<11x128x128xbf16, #tpu.memory_space<vmem>>, vector<1x128x128xbf16>
    %72 = vector.shape_cast %71 : vector<1x128x128xbf16> to vector<128x128xbf16>
    %cst_43 = arith.constant dense<0.000000e+00> : vector<128x128xf32>
    %73 = tpu.matmul %70, %72, %cst_43 {dimension_numbers = #tpu.dot_dimension_numbers<[1], [0], [0], [1], [0, 0, 1, 1], [], []>} : vector<128x128xbf16>, vector<128x128xbf16>, vector<128x128xf32> -> vector<128x128xf32>
    %cst_44 = arith.constant 0.00999999977 : f32
    %74 = vector.broadcast %cst_44 : f32 to vector<128x128xf32>
    %75 = arith.mulf %74, %73 : vector<128x128xf32>
    %76 = arith.maximumf %73, %75 : vector<128x128xf32>
    %77 = arith.truncf %76 : vector<128x128xf32> to vector<128x128xbf16>
    %c10 = arith.constant 10 : index
    %c0_45 = arith.constant 0 : index
    %c0_46 = arith.constant 0 : index
    %78 = vector.load %arg3[%c10, %c0_45, %c0_46] : memref<11x128x128xbf16, #tpu.memory_space<vmem>>, vector<1x128x128xbf16>
    %79 = vector.shape_cast %78 : vector<1x128x128xbf16> to vector<128x128xbf16>
    %cst_47 = arith.constant dense<0.000000e+00> : vector<128x128xf32>
    %80 = tpu.matmul %77, %79, %cst_47 {dimension_numbers = #tpu.dot_dimension_numbers<[1], [0], [0], [1], [0, 0, 1, 1], [], []>} : vector<128x128xbf16>, vector<128x128xbf16>, vector<128x128xf32> -> vector<128x128xf32>
    %cst_48 = arith.constant 0.00999999977 : f32
    %81 = vector.broadcast %cst_48 : f32 to vector<128x128xf32>
    %82 = arith.mulf %81, %80 : vector<128x128xf32>
    %83 = arith.maximumf %80, %82 : vector<128x128xf32>
    %84 = arith.truncf %83 : vector<128x128xf32> to vector<128x128xbf16>
    %c0_49 = arith.constant 0 : index
    %c0_50 = arith.constant 0 : index
    %85 = vector.load %arg4[%c0_49, %c0_50] : memref<128x8xbf16, #tpu.memory_space<vmem>>, vector<128x8xbf16>
    %cst_51 = arith.constant dense<0.000000e+00> : vector<128x8xf32>
    %86 = tpu.matmul %84, %85, %cst_51 {dimension_numbers = #tpu.dot_dimension_numbers<[1], [0], [0], [1], [0, 0, 1, 1], [], []>} : vector<128x128xbf16>, vector<128x8xbf16>, vector<128x8xf32> -> vector<128x8xf32>
    %c0_52 = arith.constant 0 : index
    %c0_53 = arith.constant 0 : index
    %87 = vector.load %arg5[%c0_52, %c0_53] : memref<128x8xf32, #tpu.memory_space<vmem>>, vector<128x8xf32>
    tpu.vector_store %arg5[%c0_52, %c0_53], %86 {strides = array<i32>} : memref<128x8xf32, #tpu.memory_space<vmem>>, vector<128x8xf32>,
    return
  }
  func.func @transform_0(%arg0: i32) -> (i32, i32) {
    %c0_i32 = arith.constant 0 : i32
    %c0_i32_0 = arith.constant 0 : i32
    return %arg0, %c0_i32 : i32, i32
  }
  func.func @transform_1(%arg0: i32) -> (i32, i32) {
    %c0_i32 = arith.constant 0 : i32
    %c0_i32_0 = arith.constant 0 : i32
    %c0_i32_1 = arith.constant 0 : i32
    return %c0_i32, %c0_i32_0 : i32, i32
  }
  func.func @transform_2(%arg0: i32) -> (i32, i32, i32) {
    %c0_i32 = arith.constant 0 : i32
    %c0_i32_0 = arith.constant 0 : i32
    %c0_i32_1 = arith.constant 0 : i32
    %c0_i32_2 = arith.constant 0 : i32
    return %c0_i32, %c0_i32_0, %c0_i32_1 : i32, i32, i32
  }
  func.func @transform_3(%arg0: i32) -> (i32, i32) {
    %c0_i32 = arith.constant 0 : i32
    %c0_i32_0 = arith.constant 0 : i32
    %c0_i32_1 = arith.constant 0 : i32
    return %c0_i32, %c0_i32_0 : i32, i32
  }
  func.func @transform_4(%arg0: i32) -> (i32, i32) {
    %c0_i32 = arith.constant 0 : i32
    %c0_i32_0 = arith.constant 0 : i32
    return %arg0, %c0_i32 : i32, i32
  }
}

</mosaic_0001>

<llo_original>
// kernel: tpu_custom_call.1
$region0: #{tpu_custom_call.1}
  #allocation0 [shape = 'u32[]', space=smem, size = 0x4, offset = 0x4, fixed_abs, tag = 'smem constant byte address 0x4 - core index']
  #allocation1 [shape = 'u32[72,128]{1,0:T(1,128)}', space=vmem, size = 0x9000, scoped, tag = 'internal scratch']
  %s0 = inlined_call_operand.vmem [shape: f32[256,16], index: 0, kind: input, shape index: {}]
  %s1 = inlined_call_operand.vmem [shape: bf16[16,128], index: 1, kind: input, shape index: {}]
  %s2 = inlined_call_operand.hbm [shape: bf16[11,128,128], index: 2, kind: input, shape index: {}]
  %s3 = inlined_call_operand.vmem [shape: bf16[128,8], index: 3, kind: input, shape index: {}]
  %s4 = inlined_call_operand.vmem [shape: f32[256,8], index: 4, kind: output, shape index: {}]
  %s5 = sld [smem:[#allocation0]]
  $region53: #{tpu_custom_call.1} parent=0
    _
  %s7 = ssub.s32 1, %s5
  %s8 = scalar_select 0, %s7, %s5
  $region1: #{tpu_custom_call.1} parent=0
    #allocation2 [shape = 'u8[360448]{0}', space=vmem, size = 0x58000, scoped, tag = 'input window, operand 2, single buffered']
    #allocation3 [shape = 's32[2]{0}', space=sflag, size = 0x8, scoped, tag = 'scoped memory for tpu_custom_call.1']
    %9 = vsyncpa [#allocation3], 0
    loop: start=0, step=1, limit=4
    $region2: #{tpu_custom_call.1} parent=1 // loop_pre_header
      _
    $region3: #{tpu_custom_call.1} parent=1 // loop_header
      %s11 = sphi 0, %s15
      %p12 = scmp.ge.s32.totalorder %s11, 4
      %s21 = sphi 0, %s23
      %s24 = sphi 0, %s21
      %s25 = sphi 0, %s24
      %s41 = sphi 0, %s25
      %s45 = sphi 0, %s45
      %s47 = sphi 0, %s45
      %s48 = sphi 0, %s47
      %s62 = sphi 0, %s48
      %s66 = sphi 0, %s66
      %s68 = sphi 0, %s66
      %s69 = sphi 0, %s68
      %s83 = sphi 0, %s69
      %s87 = sphi 0, %s87
      %s89 = sphi 0, %s87
      %s90 = sphi 0, %s89
      %s104 = sphi 0, %s90
      %s110 = sphi 0, %s112
      %s113 = sphi 0, %s110
      %s114 = sphi 0, %s113
      %s130 = sphi 0, %s114
    $region4: #{tpu_custom_call.1} parent=1 // loop_header_branch
      %14 = sbr.rel (%p12) target = $region8
    $region5: #{tpu_custom_call.1} parent=1 // loop_body
      %s16 = ssub.s32 %s11, 1
      %s17 = ssub.s32 %s11, 2
      %s18 = sadd.s32 %s11, 1
      %s19 = ssub.s32 %s11, %s18
      %p20 = scmp.eq.s32.totalorder %s19, 0
      %s22 = sadd.s32 %s21, 1
      %s23 = scalar_select %p20, %s21, %s22
      %p26 = pneg %p20
      %p27 = scmp.eq.s32.totalorder %s11, 1
      %p28 = por %p26, %p27
      %p29 = scmp.ne.s32.totalorder %s21, %s24
      %p30 = scmp.eq.s32.totalorder %s11, 0
      %p31 = por %p29, %p30
      %p32 = scmp.ne.s32.totalorder %s21, %s24
      %p33 = scmp.eq.s32.totalorder %s16, 1
      %p34 = por %p32, %p33
      %p35 = scmp.ne.s32.totalorder %s24, %s25
      %p36 = scmp.eq.s32.totalorder %s16, 0
      %p37 = por %p35, %p36
      %p38 = scmp.ne.s32.totalorder %s24, %s25
      %p39 = scmp.eq.s32.totalorder %s17, 1
      %p40 = por %p38, %p39
      %p42 = scmp.ne.s32.totalorder %s25, %s41
      %p43 = scmp.eq.s32.totalorder %s17, 0
      %p44 = por %p42, %p43
      %s46 = sadd.s32 %s45, 1
      %p49 = scmp.eq.s32.totalorder %s11, 1
      %p50 = scmp.ne.s32.totalorder %s45, %s47
      %p51 = scmp.eq.s32.totalorder %s11, 0
      %p52 = por %p50, %p51
      %p53 = scmp.ne.s32.totalorder %s45, %s47
      %p54 = scmp.eq.s32.totalorder %s16, 1
      %p55 = por %p53, %p54
      %p56 = scmp.ne.s32.totalorder %s47, %s48
      %p57 = scmp.eq.s32.totalorder %s16, 0
      %p58 = por %p56, %p57
      %p59 = scmp.ne.s32.totalorder %s47, %s48
      %p60 = scmp.eq.s32.totalorder %s17, 1
      %p61 = por %p59, %p60
      %p63 = scmp.ne.s32.totalorder %s48, %s62
      %p64 = scmp.eq.s32.totalorder %s17, 0
      %p65 = por %p63, %p64
      %s67 = sadd.s32 %s66, 1
      %p70 = scmp.eq.s32.totalorder %s11, 1
      %p71 = scmp.ne.s32.totalorder %s66, %s68
      %p72 = scmp.eq.s32.totalorder %s11, 0
      %p73 = por %p71, %p72
      %p74 = scmp.ne.s32.totalorder %s66, %s68
      %p75 = scmp.eq.s32.totalorder %s16, 1
      %p76 = por %p74, %p75
      %p77 = scmp.ne.s32.totalorder %s68, %s69
      %p78 = scmp.eq.s32.totalorder %s16, 0
      %p79 = por %p77, %p78
      %p80 = scmp.ne.s32.totalorder %s68, %s69
      %p81 = scmp.eq.s32.totalorder %s17, 1
      %p82 = por %p80, %p81
      %p84 = scmp.ne.s32.totalorder %s69, %s83
      %p85 = scmp.eq.s32.totalorder %s17, 0
      %p86 = por %p84, %p85
      %s88 = sadd.s32 %s87, 1
      %p91 = scmp.eq.s32.totalorder %s11, 1
      %p92 = scmp.ne.s32.totalorder %s87, %s89
      %p93 = scmp.eq.s32.totalorder %s11, 0
      %p94 = por %p92, %p93
      %p95 = scmp.ne.s32.totalorder %s87, %s89
      %p96 = scmp.eq.s32.totalorder %s16, 1
      %p97 = por %p95, %p96
      %p98 = scmp.ne.s32.totalorder %s89, %s90
      %p99 = scmp.eq.s32.totalorder %s16, 0
      %p100 = por %p98, %p99
      %p101 = scmp.ne.s32.totalorder %s89, %s90
      %p102 = scmp.eq.s32.totalorder %s17, 1
      %p103 = por %p101, %p102
      %p105 = scmp.ne.s32.totalorder %s90, %s104
      %p106 = scmp.eq.s32.totalorder %s17, 0
      %p107 = por %p105, %p106
      %s108 = ssub.s32 %s11, %s18
      %p109 = scmp.eq.s32.totalorder %s108, 0
      %s111 = sadd.s32 %s110, 1
      %s112 = scalar_select %p109, %s110, %s111
      %p115 = pneg %p109
      %p116 = scmp.eq.s32.totalorder %s11, 1
      %p117 = por %p115, %p116
      %p118 = scmp.ne.s32.totalorder %s110, %s113
      %p119 = scmp.eq.s32.totalorder %s11, 0
      %p120 = por %p118, %p119
      %p121 = scmp.ne.s32.totalorder %s110, %s113
      %p122 = scmp.eq.s32.totalorder %s16, 1
      %p123 = por %p121, %p122
      %p124 = scmp.ne.s32.totalorder %s113, %s114
      %p125 = scmp.eq.s32.totalorder %s16, 0
      %p126 = por %p124, %p125
      %p127 = scmp.ne.s32.totalorder %s113, %s114
      %p128 = scmp.eq.s32.totalorder %s17, 1
      %p129 = por %p127, %p128
      %p131 = scmp.ne.s32.totalorder %s114, %s130
      %p132 = scmp.eq.s32.totalorder %s17, 0
      %p133 = por %p131, %p132
      %p134 = scmp.le.s32.totalorder 1, %s11
      %p135 = scmp.lt.s32.totalorder %s11, 3
      %p136 = pnand %p134, %p135
      %p137 = pneg %p136
      // Predicated region
      $region9: #{tpu_custom_call.1} parent=5 // pred_check
        _
      $region10: #{tpu_custom_call.1} parent=5 // pred_check_branch
        %139 = sbr.rel (%p136) target = $region12
      $region11: #{tpu_custom_call.1} parent=5 // pred_region
        %s140 = ssub.s32 %s11, 1
        // Predicated region
        $region13: #{tpu_custom_call.1} parent=11 // pred_check
          %p141 = pneg %p58
        $region14: #{tpu_custom_call.1} parent=11 // pred_check_branch
          %143 = sbr.rel (%p141) target = $region16
        $region15: #{tpu_custom_call.1} parent=11 // pred_region
          _
        $region16: #{tpu_custom_call.1} parent=11 // pred_fallthru
          _
        // Predicated region
        $region17: #{tpu_custom_call.1} parent=11 // pred_check
          %p144 = pneg %p79
        $region18: #{tpu_custom_call.1} parent=11 // pred_check_branch
          %146 = sbr.rel (%p144) target = $region20
        $region19: #{tpu_custom_call.1} parent=11 // pred_region
          %148 = vsyncadd [#allocation3], 0
          %s149 = sshll.u32 %s2, 4
          %s150 = int_to_ptr.hbm [resolvable:$true] %s149
          %s151 = sshll.u32 [#allocation2], 4
          %s152 = int_to_ptr.vmem [resolvable:$true] %s151
          %157 = dma.hbm_to_vmem [thread:$0]  %s150, 11264, %s152, [#allocation3], 64, 64, 4
        $region20: #{tpu_custom_call.1} parent=11 // pred_fallthru
          _
        // Predicated region
        $region21: #{tpu_custom_call.1} parent=11 // pred_check
          %p158 = pneg %p100
        $region22: #{tpu_custom_call.1} parent=11 // pred_check_branch
          %160 = sbr.rel (%p158) target = $region24
        $region23: #{tpu_custom_call.1} parent=11 // pred_region
          _
        $region24: #{tpu_custom_call.1} parent=11 // pred_fallthru
          _
      $region12: #{tpu_custom_call.1} parent=5 // pred_fallthru
        _
      %p161 = scmp.lt.s32.totalorder %s11, 2
      // Predicated region
      $region25: #{tpu_custom_call.1} parent=5 // pred_check
        %p162 = pneg %p161
      $region26: #{tpu_custom_call.1} parent=5 // pred_check_branch
        %164 = sbr.rel (%p162) target = $region28
      $region27: #{tpu_custom_call.1} parent=5 // pred_region
        // Predicated region
        $region29: #{tpu_custom_call.1} parent=27 // pred_check
          %p165 = pneg %p31
        $region30: #{tpu_custom_call.1} parent=27 // pred_check_branch
          %167 = sbr.rel (%p165) target = $region32
        $region31: #{tpu_custom_call.1} parent=27 // pred_region
          %s168 = smul.u32 16, %s11
          %p169 = scmp.lt.s32.totalorder %s168, 31
          %s170 = scalar_select %p169, %s168, 31
          %s171 = smul.addr %s170, 8
          %s172 = scalar_lea.vmem %s0, %s171
          %s173 = smul.u32 16, %s11
        $region32: #{tpu_custom_call.1} parent=27 // pred_fallthru
          _
      $region28: #{tpu_custom_call.1} parent=5 // pred_fallthru
        _
      %p174 = scmp.le.s32.totalorder 1, %s11
      %p175 = scmp.lt.s32.totalorder %s11, 3
      %p176 = pnand %p174, %p175
      %p177 = pneg %p176
      // Predicated region
      $region33: #{tpu_custom_call.1} parent=5 // pred_check
        _
      $region34: #{tpu_custom_call.1} parent=5 // pred_check_branch
        %179 = sbr.rel (%p176) target = $region36
      $region35: #{tpu_custom_call.1} parent=5 // pred_region
        %s180 = ssub.s32 %s11, 1
        // Predicated region
        $region37: #{tpu_custom_call.1} parent=35 // pred_check
          %p181 = pneg %p79
        $region38: #{tpu_custom_call.1} parent=35 // pred_check_branch
          %183 = sbr.rel (%p181) target = $region40
        $region39: #{tpu_custom_call.1} parent=35 // pred_region
          %185 = dma.done [#allocation3], 11264
        $region40: #{tpu_custom_call.1} parent=35 // pred_fallthru
          _
        %s186 = smul.u32 16, %s16
        %p187 = scmp.lt.s32.totalorder %s186, 31
        %s188 = scalar_select %p187, %s186, 31
        %s189 = smul.addr %s188, 8
        %s190 = scalar_lea.vmem %s0, %s189
        %p191 = pneg %p37
        %p192 = pneg %p34
        %p193 = pneg %p58
        %p194 = pneg %p55
        %p195 = pneg %p79
        %p196 = pneg %p76
        %p197 = pneg %p100
        %p198 = pneg %p97
        %p199 = pneg %p126
        %p200 = pneg %p123
        %s201 = smul.u32 16, %s16
        %p202 = scmp.lt.s32.totalorder %s201, 31
        %s203 = scalar_select %p202, %s201, 31
        %s204 = smul.addr %s203, 8
        %s205 = scalar_lea.vmem %s4, %s204
        %s206 = smul.u32 16, %s16
        %p207 = scmp.lt.s32.totalorder %s206, 31
        %s208 = scalar_select %p207, %s206, 31
        %s209 = smul.addr %s208, 8
        %s210 = scalar_lea.vmem %s0, %s209
        %s211 = smul.u32 16, %s16
        %s212 = smul.u32 16, %s16
        %p213 = scmp.lt.s32.totalorder %s212, 31
        %s214 = scalar_select %p213, %s212, 31
        %s215 = smul.addr %s214, 8
        %s216 = scalar_lea.vmem %s4, %s215
        %s217 = smul.u32 16, %s16
        %v219 = vld [vmem:[%s210] sm:$0xff]
        %v220 = vld [vmem:[%s210 + $0x8] sm:$0xff]
        %v221 = vld [vmem:[%s210 + $0x10] sm:$0xff]
        %v222 = vld [vmem:[%s210 + $0x18] sm:$0xff]
        %v223 = vld [vmem:[%s210 + $0x20] sm:$0xff]
        %v224 = vld [vmem:[%s210 + $0x28] sm:$0xff]
        %v225 = vld [vmem:[%s210 + $0x30] sm:$0xff]
        %v226 = vld [vmem:[%s210 + $0x38] sm:$0xff]
        %v227 = vld [vmem:[%s210 + $0x40] sm:$0xff]
        %v228 = vld [vmem:[%s210 + $0x48] sm:$0xff]
        %v229 = vld [vmem:[%s210 + $0x50] sm:$0xff]
        %v230 = vld [vmem:[%s210 + $0x58] sm:$0xff]
        %v231 = vld [vmem:[%s210 + $0x60] sm:$0xff]
        %v232 = vld [vmem:[%s210 + $0x68] sm:$0xff]
        %v233 = vld [vmem:[%s210 + $0x70] sm:$0xff]
        %v234 = vld [vmem:[%s210 + $0x78] sm:$0xff]
        %v235 = vpack.c.bf16 %v220, %v219
        %v236 = vpack.c.bf16 %v222, %v221
        %v237 = vpack.c.bf16 %v224, %v223
        %v238 = vpack.c.bf16 %v226, %v225
        %v239 = vpack.c.bf16 %v228, %v227
        %v240 = vpack.c.bf16 %v230, %v229
        %v241 = vpack.c.bf16 %v232, %v231
        %v242 = vpack.c.bf16 %v234, %v233
        %v243 = vld [vmem:[%s1] sm:$0xf]
        %v244 = vld [vmem:[%s1 + $0x4] sm:$0xf]
        %v247 = vunpack.c.l.b16 %v243
        %v248 = vunpack.c.l.b16 %v244
        %v249 = vpack.c.b16 %v248, %v247
        %vm251 = vcmask 130048
        %v253 = vsel %vm251, %v235, 0
        %v256 = vsel %vm251, %v236, 0
        %v259 = vsel %vm251, %v237, 0
        %v262 = vsel %vm251, %v238, 0
        %v265 = vsel %vm251, %v239, 0
        %v268 = vsel %vm251, %v240, 0
        %v271 = vsel %vm251, %v241, 0
        %v274 = vsel %vm251, %v242, 0
        %276 = vmatpush.bf16.msra.mxu0 0
        %277 = vmatpush.bf16.msra.mxu0 0
        %278 = vmatpush.bf16.msra.mxu0 0
        %279 = vmatpush.bf16.msra.mxu0 0
        %280 = vmatpush.bf16.msra.mxu0 0
        %281 = vmatpush.bf16.msra.mxu0 0
        %282 = vmatpush.bf16.msra.mxu0 0
        %283 = vmatpush.bf16.msra.mxu0 %v249
        %284 = vmatmul.bf16.gmra.mxu0 %v253
        %v285 = vpop.f32.mrf.mxu0
        %v286 = vadd.f32 0.0, %v285
        %v287 = vpop.f32.mrf.mxu0
        %v288 = vadd.f32 0.0, %v287
        %289 = vmatmul.bf16.gmra.mxu0 %v256
        %v290 = vpop.f32.mrf.mxu0
        %v291 = vadd.f32 0.0, %v290
        %v292 = vpop.f32.mrf.mxu0
        %v293 = vadd.f32 0.0, %v292
        %294 = vmatmul.bf16.gmra.mxu0 %v259
        %v295 = vpop.f32.mrf.mxu0
        %v296 = vadd.f32 0.0, %v295
        %v297 = vpop.f32.mrf.mxu0
        %v298 = vadd.f32 0.0, %v297
        %299 = vmatmul.bf16.gmra.mxu0 %v262
        %v300 = vpop.f32.mrf.mxu0
        %v301 = vadd.f32 0.0, %v300
        %v302 = vpop.f32.mrf.mxu0
        %v303 = vadd.f32 0.0, %v302
        %304 = vmatmul.bf16.gmra.mxu0 %v265
        %v305 = vpop.f32.mrf.mxu0
        %v306 = vadd.f32 0.0, %v305
        %v307 = vpop.f32.mrf.mxu0
        %v308 = vadd.f32 0.0, %v307
        %309 = vmatmul.bf16.gmra.mxu0 %v268
        %v310 = vpop.f32.mrf.mxu0
        %v311 = vadd.f32 0.0, %v310
        %v312 = vpop.f32.mrf.mxu0
        %v313 = vadd.f32 0.0, %v312
        %314 = vmatmul.bf16.gmra.mxu0 %v271
        %v315 = vpop.f32.mrf.mxu0
        %v316 = vadd.f32 0.0, %v315
        %v317 = vpop.f32.mrf.mxu0
        %v318 = vadd.f32 0.0, %v317
        %319 = vmatmul.bf16.gmra.mxu0 %v274
        %v320 = vpop.f32.mrf.mxu0
        %v321 = vadd.f32 0.0, %v320
        %v322 = vpop.f32.mrf.mxu0
        %v323 = vadd.f32 0.0, %v322
        %324 = vdwg.mxu0
        %v325 = vmul.f32 %v286, 0.01
        %v326 = vmul.f32 %v288, 0.01
        %v327 = vmul.f32 %v291, 0.01
        %v328 = vmul.f32 %v293, 0.01
        %v329 = vmul.f32 %v296, 0.01
        %v330 = vmul.f32 %v298, 0.01
        %v331 = vmul.f32 %v301, 0.01
        %v332 = vmul.f32 %v303, 0.01
        %v333 = vmul.f32 %v306, 0.01
        %v334 = vmul.f32 %v308, 0.01
        %v335 = vmul.f32 %v311, 0.01
        %v336 = vmul.f32 %v313, 0.01
        %v337 = vmul.f32 %v316, 0.01
        %v338 = vmul.f32 %v318, 0.01
        %v339 = vmul.f32 %v321, 0.01
        %v340 = vmul.f32 %v323, 0.01
        %v341 = vmax.f32 %v286, %v325
        %v342 = vmax.f32 %v288, %v326
        %v343 = vmax.f32 %v291, %v327
        %v344 = vmax.f32 %v293, %v328
        %v345 = vmax.f32 %v296, %v329
        %v346 = vmax.f32 %v298, %v330
        %v347 = vmax.f32 %v301, %v331
        %v348 = vmax.f32 %v303, %v332
        %v349 = vmax.f32 %v306, %v333
        %v350 = vmax.f32 %v308, %v334
        %v351 = vmax.f32 %v311, %v335
        %v352 = vmax.f32 %v313, %v336
        %v353 = vmax.f32 %v316, %v337
        %v354 = vmax.f32 %v318, %v338
        %v355 = vmax.f32 %v321, %v339
        %v356 = vmax.f32 %v323, %v340
        %v357 = vpack.c.bf16 %v342, %v341
        %v358 = vpack.c.bf16 %v344, %v343
        %v359 = vpack.c.bf16 %v346, %v345
        %v360 = vpack.c.bf16 %v348, %v347
        %v361 = vpack.c.bf16 %v350, %v349
        %v362 = vpack.c.bf16 %v352, %v351
        %v363 = vpack.c.bf16 %v354, %v353
        %v364 = vpack.c.bf16 %v356, %v355
        %v365 = vld [vmem:[#allocation2] sm:$0xf]
        %v366 = vld [vmem:[#allocation2 + $0x4] sm:$0xf]
        %v367 = vld [vmem:[#allocation2 + $0x8] sm:$0xf]
        %v368 = vld [vmem:[#allocation2 + $0xc] sm:$0xf]
        %v369 = vld [vmem:[#allocation2 + $0x10] sm:$0xf]
        %v370 = vld [vmem:[#allocation2 + $0x14] sm:$0xf]
        %v371 = vld [vmem:[#allocation2 + $0x18] sm:$0xf]
        %v372 = vld [vmem:[#allocation2 + $0x1c] sm:$0xf]
        %v373 = vld [vmem:[#allocation2 + $0x20] sm:$0xf]
        %v374 = vld [vmem:[#allocation2 + $0x24] sm:$0xf]
        %v375 = vld [vmem:[#allocation2 + $0x28] sm:$0xf]
        %v376 = vld [vmem:[#allocation2 + $0x2c] sm:$0xf]
        %v377 = vld [vmem:[#allocation2 + $0x30] sm:$0xf]
        %v378 = vld [vmem:[#allocation2 + $0x34] sm:$0xf]
        %v379 = vld [vmem:[#allocation2 + $0x38] sm:$0xf]
        %v380 = vld [vmem:[#allocation2 + $0x3c] sm:$0xf]
        %v397 = vunpack.c.l.b16 %v365
        %v398 = vunpack.c.l.b16 %v366
        %v399 = vunpack.c.l.b16 %v367
        %v400 = vunpack.c.l.b16 %v368
        %v401 = vunpack.c.l.b16 %v369
        %v402 = vunpack.c.l.b16 %v370
        %v403 = vunpack.c.l.b16 %v371
        %v404 = vunpack.c.l.b16 %v372
        %v405 = vunpack.c.l.b16 %v373
        %v406 = vunpack.c.l.b16 %v374
        %v407 = vunpack.c.l.b16 %v375
        %v408 = vunpack.c.l.b16 %v376
        %v409 = vunpack.c.l.b16 %v377
        %v410 = vunpack.c.l.b16 %v378
        %v411 = vunpack.c.l.b16 %v379
        %v412 = vunpack.c.l.b16 %v380
        %v413 = vpack.c.b16 %v398, %v397
        %v414 = vpack.c.b16 %v400, %v399
        %v415 = vpack.c.b16 %v402, %v401
        %v416 = vpack.c.b16 %v404, %v403
        %v417 = vpack.c.b16 %v406, %v405
        %v418 = vpack.c.b16 %v408, %v407
        %v419 = vpack.c.b16 %v410, %v409
        %v420 = vpack.c.b16 %v412, %v411
        %429 = vmatpush.bf16.msra.mxu0 %v420
        %430 = vmatpush.bf16.msra.mxu0 %v419
        %431 = vmatpush.bf16.msra.mxu0 %v418
        %432 = vmatpush.bf16.msra.mxu0 %v417
        %433 = vmatpush.bf16.msra.mxu0 %v416
        %434 = vmatpush.bf16.msra.mxu0 %v415
        %435 = vmatpush.bf16.msra.mxu0 %v414
        %436 = vmatpush.bf16.msra.mxu0 %v413
        %437 = vmatmul.bf16.gmra.mxu0 %v357
        %v438 = vpop.f32.mrf.mxu0
        %v439 = vadd.f32 0.0, %v438
        %v440 = vpop.f32.mrf.mxu0
        %v441 = vadd.f32 0.0, %v440
        %442 = vmatmul.bf16.gmra.mxu0 %v358
        %v443 = vpop.f32.mrf.mxu0
        %v444 = vadd.f32 0.0, %v443
        %v445 = vpop.f32.mrf.mxu0
        %v446 = vadd.f32 0.0, %v445
        %447 = vmatmul.bf16.gmra.mxu0 %v359
        %v448 = vpop.f32.mrf.mxu0
        %v449 = vadd.f32 0.0, %v448
        %v450 = vpop.f32.mrf.mxu0
        %v451 = vadd.f32 0.0, %v450
        %452 = vmatmul.bf16.gmra.mxu0 %v360
        %v453 = vpop.f32.mrf.mxu0
        %v454 = vadd.f32 0.0, %v453
        %v455 = vpop.f32.mrf.mxu0
        %v456 = vadd.f32 0.0, %v455
        %457 = vmatmul.bf16.gmra.mxu0 %v361
        %v458 = vpop.f32.mrf.mxu0
        %v459 = vadd.f32 0.0, %v458
        %v460 = vpop.f32.mrf.mxu0
        %v461 = vadd.f32 0.0, %v460
        %462 = vmatmul.bf16.gmra.mxu0 %v362
        %v463 = vpop.f32.mrf.mxu0
        %v464 = vadd.f32 0.0, %v463
        %v465 = vpop.f32.mrf.mxu0
        %v466 = vadd.f32 0.0, %v465
        %467 = vmatmul.bf16.gmra.mxu0 %v363
        %v468 = vpop.f32.mrf.mxu0
        %v469 = vadd.f32 0.0, %v468
        %v470 = vpop.f32.mrf.mxu0
        %v471 = vadd.f32 0.0, %v470
        %472 = vmatmul.bf16.gmra.mxu0 %v364
        %v473 = vpop.f32.mrf.mxu0
        %v474 = vadd.f32 0.0, %v473
        %v475 = vpop.f32.mrf.mxu0
        %v476 = vadd.f32 0.0, %v475
        %477 = vdwg.mxu0
        %v478 = vmul.f32 %v439, 0.01
        %v479 = vmul.f32 %v441, 0.01
        %v480 = vmul.f32 %v444, 0.01
        %v481 = vmul.f32 %v446, 0.01
        %v482 = vmul.f32 %v449, 0.01
        %v483 = vmul.f32 %v451, 0.01
        %v484 = vmul.f32 %v454, 0.01
        %v485 = vmul.f32 %v456, 0.01
        %v486 = vmul.f32 %v459, 0.01
        %v487 = vmul.f32 %v461, 0.01
        %v488 = vmul.f32 %v464, 0.01
        %v489 = vmul.f32 %v466, 0.01
        %v490 = vmul.f32 %v469, 0.01
        %v491 = vmul.f32 %v471, 0.01
        %v492 = vmul.f32 %v474, 0.01
        %v493 = vmul.f32 %v476, 0.01
        %v494 = vmax.f32 %v439, %v478
        %v495 = vmax.f32 %v441, %v479
        %v496 = vmax.f32 %v444, %v480
        %v497 = vmax.f32 %v446, %v481
        %v498 = vmax.f32 %v449, %v482
        %v499 = vmax.f32 %v451, %v483
        %v500 = vmax.f32 %v454, %v484
        %v501 = vmax.f32 %v456, %v485
        %v502 = vmax.f32 %v459, %v486
        %v503 = vmax.f32 %v461, %v487
        %v504 = vmax.f32 %v464, %v488
        %v505 = vmax.f32 %v466, %v489
        %v506 = vmax.f32 %v469, %v490
        %v507 = vmax.f32 %v471, %v491
        %v508 = vmax.f32 %v474, %v492
        %v509 = vmax.f32 %v476, %v493
        %v510 = vpack.c.bf16 %v495, %v494
        %v511 = vpack.c.bf16 %v497, %v496
        %v512 = vpack.c.bf16 %v499, %v498
        %v513 = vpack.c.bf16 %v501, %v500
        %v514 = vpack.c.bf16 %v503, %v502
        %v515 = vpack.c.bf16 %v505, %v504
        %v516 = vpack.c.bf16 %v507, %v506
        %v517 = vpack.c.bf16 %v509, %v508
        %s518 = scalar_lea.vmem [#allocation2], 64
        %v519 = vld [vmem:[%s518] sm:$0xf]
        %v520 = vld [vmem:[%s518 + $0x4] sm:$0xf]
        %v521 = vld [vmem:[%s518 + $0x8] sm:$0xf]
        %v522 = vld [vmem:[%s518 + $0xc] sm:$0xf]
        %v523 = vld [vmem:[%s518 + $0x10] sm:$0xf]
        %v524 = vld [vmem:[%s518 + $0x14] sm:$0xf]
        %v525 = vld [vmem:[%s518 + $0x18] sm:$0xf]
        %v526 = vld [vmem:[%s518 + $0x1c] sm:$0xf]
        %v527 = vld [vmem:[%s518 + $0x20] sm:$0xf]
        %v528 = vld [vmem:[%s518 + $0x24] sm:$0xf]
        %v529 = vld [vmem:[%s518 + $0x28] sm:$0xf]
        %v530 = vld [vmem:[%s518 + $0x2c] sm:$0xf]
        %v531 = vld [vmem:[%s518 + $0x30] sm:$0xf]
        %v532 = vld [vmem:[%s518 + $0x34] sm:$0xf]
        %v533 = vld [vmem:[%s518 + $0x38] sm:$0xf]
        %v534 = vld [vmem:[%s518 + $0x3c] sm:$0xf]
        %v551 = vunpack.c.l.b16 %v519
        %v552 = vunpack.c.l.b16 %v520
        %v553 = vunpack.c.l.b16 %v521
        %v554 = vunpack.c.l.b16 %v522
        %v555 = vunpack.c.l.b16 %v523
        %v556 = vunpack.c.l.b16 %v524
        %v557 = vunpack.c.l.b16 %v525
        %v558 = vunpack.c.l.b16 %v526
        %v559 = vunpack.c.l.b16 %v527
        %v560 = vunpack.c.l.b16 %v528
        %v561 = vunpack.c.l.b16 %v529
        %v562 = vunpack.c.l.b16 %v530
        %v563 = vunpack.c.l.b16 %v531
        %v564 = vunpack.c.l.b16 %v532
        %v565 = vunpack.c.l.b16 %v533
        %v566 = vunpack.c.l.b16 %v534
        %v567 = vpack.c.b16 %v552, %v551
        %v568 = vpack.c.b16 %v554, %v553
        %v569 = vpack.c.b16 %v556, %v555
        %v570 = vpack.c.b16 %v558, %v557
        %v571 = vpack.c.b16 %v560, %v559
        %v572 = vpack.c.b16 %v562, %v561
        %v573 = vpack.c.b16 %v564, %v563
        %v574 = vpack.c.b16 %v566, %v565
        %583 = vmatpush.bf16.msra.mxu0 %v574
        %584 = vmatpush.bf16.msra.mxu0 %v573
        %585 = vmatpush.bf16.msra.mxu0 %v572
        %586 = vmatpush.bf16.msra.mxu0 %v571
        %587 = vmatpush.bf16.msra.mxu0 %v570
        %588 = vmatpush.bf16.msra.mxu0 %v569
        %589 = vmatpush.bf16.msra.mxu0 %v568
        %590 = vmatpush.bf16.msra.mxu0 %v567
        %591 = vmatmul.bf16.gmra.mxu0 %v510
        %v592 = vpop.f32.mrf.mxu0
        %v593 = vadd.f32 0.0, %v592
        %v594 = vpop.f32.mrf.mxu0
        %v595 = vadd.f32 0.0, %v594
        %596 = vmatmul.bf16.gmra.mxu0 %v511
        %v597 = vpop.f32.mrf.mxu0
        %v598 = vadd.f32 0.0, %v597
        %v599 = vpop.f32.mrf.mxu0
        %v600 = vadd.f32 0.0, %v599
        %601 = vmatmul.bf16.gmra.mxu0 %v512
        %v602 = vpop.f32.mrf.mxu0
        %v603 = vadd.f32 0.0, %v602
        %v604 = vpop.f32.mrf.mxu0
        %v605 = vadd.f32 0.0, %v604
        %606 = vmatmul.bf16.gmra.mxu0 %v513
        %v607 = vpop.f32.mrf.mxu0
        %v608 = vadd.f32 0.0, %v607
        %v609 = vpop.f32.mrf.mxu0
        %v610 = vadd.f32 0.0, %v609
        %611 = vmatmul.bf16.gmra.mxu0 %v514
        %v612 = vpop.f32.mrf.mxu0
        %v613 = vadd.f32 0.0, %v612
        %v614 = vpop.f32.mrf.mxu0
        %v615 = vadd.f32 0.0, %v614
        %616 = vmatmul.bf16.gmra.mxu0 %v515
        %v617 = vpop.f32.mrf.mxu0
        %v618 = vadd.f32 0.0, %v617
        %v619 = vpop.f32.mrf.mxu0
        %v620 = vadd.f32 0.0, %v619
        %621 = vmatmul.bf16.gmra.mxu0 %v516
        %v622 = vpop.f32.mrf.mxu0
        %v623 = vadd.f32 0.0, %v622
        %v624 = vpop.f32.mrf.mxu0
        %v625 = vadd.f32 0.0, %v624
        %626 = vmatmul.bf16.gmra.mxu0 %v517
        %v627 = vpop.f32.mrf.mxu0
        %v628 = vadd.f32 0.0, %v627
        %v629 = vpop.f32.mrf.mxu0
        %v630 = vadd.f32 0.0, %v629
        %631 = vdwg.mxu0
        %v632 = vmul.f32 %v593, 0.01
        %v633 = vmul.f32 %v595, 0.01
        %v634 = vmul.f32 %v598, 0.01
        %v635 = vmul.f32 %v600, 0.01
        %v636 = vmul.f32 %v603, 0.01
        %v637 = vmul.f32 %v605, 0.01
        %v638 = vmul.f32 %v608, 0.01
        %v639 = vmul.f32 %v610, 0.01
        %v640 = vmul.f32 %v613, 0.01
        %v641 = vmul.f32 %v615, 0.01
        %v642 = vmul.f32 %v618, 0.01
        %v643 = vmul.f32 %v620, 0.01
        %v644 = vmul.f32 %v623, 0.01
        %v645 = vmul.f32 %v625, 0.01
        %v646 = vmul.f32 %v628, 0.01
        %v647 = vmul.f32 %v630, 0.01
        %v648 = vmax.f32 %v593, %v632
        %v649 = vmax.f32 %v595, %v633
        %v650 = vmax.f32 %v598, %v634
        %v651 = vmax.f32 %v600, %v635
        %v652 = vmax.f32 %v603, %v636
        %v653 = vmax.f32 %v605, %v637
        %v654 = vmax.f32 %v608, %v638
        %v655 = vmax.f32 %v610, %v639
        %v656 = vmax.f32 %v613, %v640
        %v657 = vmax.f32 %v615, %v641
        %v658 = vmax.f32 %v618, %v642
        %v659 = vmax.f32 %v620, %v643
        %v660 = vmax.f32 %v623, %v644
        %v661 = vmax.f32 %v625, %v645
        %v662 = vmax.f32 %v628, %v646
        %v663 = vmax.f32 %v630, %v647
        %v664 = vpack.c.bf16 %v649, %v648
        %v665 = vpack.c.bf16 %v651, %v650
        %v666 = vpack.c.bf16 %v653, %v652
        %v667 = vpack.c.bf16 %v655, %v654
        %v668 = vpack.c.bf16 %v657, %v656
        %v669 = vpack.c.bf16 %v659, %v658
        %v670 = vpack.c.bf16 %v661, %v660
        %v671 = vpack.c.bf16 %v663, %v662
        %s672 = scalar_lea.vmem [#allocation2], 128
        %v673 = vld [vmem:[%s672] sm:$0xf]
        %v674 = vld [vmem:[%s672 + $0x4] sm:$0xf]
        %v675 = vld [vmem:[%s672 + $0x8] sm:$0xf]
        %v676 = vld [vmem:[%s672 + $0xc] sm:$0xf]
        %v677 = vld [vmem:[%s672 + $0x10] sm:$0xf]
        %v678 = vld [vmem:[%s672 + $0x14] sm:$0xf]
        %v679 = vld [vmem:[%s672 + $0x18] sm:$0xf]
        %v680 = vld [vmem:[%s672 + $0x1c] sm:$0xf]
        %v681 = vld [vmem:[%s672 + $0x20] sm:$0xf]
        %v682 = vld [vmem:[%s672 + $0x24] sm:$0xf]
        %v683 = vld [vmem:[%s672 + $0x28] sm:$0xf]
        %v684 = vld [vmem:[%s672 + $0x2c] sm:$0xf]
        %v685 = vld [vmem:[%s672 + $0x30] sm:$0xf]
        %v686 = vld [vmem:[%s672 + $0x34] sm:$0xf]
        %v687 = vld [vmem:[%s672 + $0x38] sm:$0xf]
        %v688 = vld [vmem:[%s672 + $0x3c] sm:$0xf]
        %v705 = vunpack.c.l.b16 %v673
        %v706 = vunpack.c.l.b16 %v674
        %v707 = vunpack.c.l.b16 %v675
        %v708 = vunpack.c.l.b16 %v676
        %v709 = vunpack.c.l.b16 %v677
        %v710 = vunpack.c.l.b16 %v678
        %v711 = vunpack.c.l.b16 %v679
        %v712 = vunpack.c.l.b16 %v680
        %v713 = vunpack.c.l.b16 %v681
        %v714 = vunpack.c.l.b16 %v682
        %v715 = vunpack.c.l.b16 %v683
        %v716 = vunpack.c.l.b16 %v684
        %v717 = vunpack.c.l.b16 %v685
        %v718 = vunpack.c.l.b16 %v686
        %v719 = vunpack.c.l.b16 %v687
        %v720 = vunpack.c.l.b16 %v688
        %v721 = vpack.c.b16 %v706, %v705
        %v722 = vpack.c.b16 %v708, %v707
        %v723 = vpack.c.b16 %v710, %v709
        %v724 = vpack.c.b16 %v712, %v711
        %v725 = vpack.c.b16 %v714, %v713
        %v726 = vpack.c.b16 %v716, %v715
        %v727 = vpack.c.b16 %v718, %v717
        %v728 = vpack.c.b16 %v720, %v719
        %737 = vmatpush.bf16.msra.mxu0 %v728
        %738 = vmatpush.bf16.msra.mxu0 %v727
        %739 = vmatpush.bf16.msra.mxu0 %v726
        %740 = vmatpush.bf16.msra.mxu0 %v725
        %741 = vmatpush.bf16.msra.mxu0 %v724
        %742 = vmatpush.bf16.msra.mxu0 %v723
        %743 = vmatpush.bf16.msra.mxu0 %v722
        %744 = vmatpush.bf16.msra.mxu0 %v721
        %745 = vmatmul.bf16.gmra.mxu0 %v664
        %v746 = vpop.f32.mrf.mxu0
        %v747 = vadd.f32 0.0, %v746
        %v748 = vpop.f32.mrf.mxu0
        %v749 = vadd.f32 0.0, %v748
        %750 = vmatmul.bf16.gmra.mxu0 %v665
        %v751 = vpop.f32.mrf.mxu0
        %v752 = vadd.f32 0.0, %v751
        %v753 = vpop.f32.mrf.mxu0
        %v754 = vadd.f32 0.0, %v753
        %755 = vmatmul.bf16.gmra.mxu0 %v666
        %v756 = vpop.f32.mrf.mxu0
        %v757 = vadd.f32 0.0, %v756
        %v758 = vpop.f32.mrf.mxu0
        %v759 = vadd.f32 0.0, %v758
        %760 = vmatmul.bf16.gmra.mxu0 %v667
        %v761 = vpop.f32.mrf.mxu0
        %v762 = vadd.f32 0.0, %v761
        %v763 = vpop.f32.mrf.mxu0
        %v764 = vadd.f32 0.0, %v763
        %765 = vmatmul.bf16.gmra.mxu0 %v668
        %v766 = vpop.f32.mrf.mxu0
        %v767 = vadd.f32 0.0, %v766
        %v768 = vpop.f32.mrf.mxu0
        %v769 = vadd.f32 0.0, %v768
        %770 = vmatmul.bf16.gmra.mxu0 %v669
        %v771 = vpop.f32.mrf.mxu0
        %v772 = vadd.f32 0.0, %v771
        %v773 = vpop.f32.mrf.mxu0
        %v774 = vadd.f32 0.0, %v773
        %775 = vmatmul.bf16.gmra.mxu0 %v670
        %v776 = vpop.f32.mrf.mxu0
        %v777 = vadd.f32 0.0, %v776
        %v778 = vpop.f32.mrf.mxu0
        %v779 = vadd.f32 0.0, %v778
        %780 = vmatmul.bf16.gmra.mxu0 %v671
        %v781 = vpop.f32.mrf.mxu0
        %v782 = vadd.f32 0.0, %v781
        %v783 = vpop.f32.mrf.mxu0
        %v784 = vadd.f32 0.0, %v783
        %785 = vdwg.mxu0
        %v786 = vmul.f32 %v747, 0.01
        %v787 = vmul.f32 %v749, 0.01
        %v788 = vmul.f32 %v752, 0.01
        %v789 = vmul.f32 %v754, 0.01
        %v790 = vmul.f32 %v757, 0.01
        %v791 = vmul.f32 %v759, 0.01
        %v792 = vmul.f32 %v762, 0.01
        %v793 = vmul.f32 %v764, 0.01
        %v794 = vmul.f32 %v767, 0.01
        %v795 = vmul.f32 %v769, 0.01
        %v796 = vmul.f32 %v772, 0.01
        %v797 = vmul.f32 %v774, 0.01
        %v798 = vmul.f32 %v777, 0.01
        %v799 = vmul.f32 %v779, 0.01
        %v800 = vmul.f32 %v782, 0.01
        %v801 = vmul.f32 %v784, 0.01
        %v802 = vmax.f32 %v747, %v786
        %v803 = vmax.f32 %v749, %v787
        %v804 = vmax.f32 %v752, %v788
        %v805 = vmax.f32 %v754, %v789
        %v806 = vmax.f32 %v757, %v790
        %v807 = vmax.f32 %v759, %v791
        %v808 = vmax.f32 %v762, %v792
        %v809 = vmax.f32 %v764, %v793
        %v810 = vmax.f32 %v767, %v794
        %v811 = vmax.f32 %v769, %v795
        %v812 = vmax.f32 %v772, %v796
        %v813 = vmax.f32 %v774, %v797
        %v814 = vmax.f32 %v777, %v798
        %v815 = vmax.f32 %v779, %v799
        %v816 = vmax.f32 %v782, %v800
        %v817 = vmax.f32 %v784, %v801
        %v818 = vpack.c.bf16 %v803, %v802
        %v819 = vpack.c.bf16 %v805, %v804
        %v820 = vpack.c.bf16 %v807, %v806
        %v821 = vpack.c.bf16 %v809, %v808
        %v822 = vpack.c.bf16 %v811, %v810
        %v823 = vpack.c.bf16 %v813, %v812
        %v824 = vpack.c.bf16 %v815, %v814
        %v825 = vpack.c.bf16 %v817, %v816
        %s826 = scalar_lea.vmem [#allocation2], 192
        %v827 = vld [vmem:[%s826] sm:$0xf]
        %v828 = vld [vmem:[%s826 + $0x4] sm:$0xf]
        %v829 = vld [vmem:[%s826 + $0x8] sm:$0xf]
        %v830 = vld [vmem:[%s826 + $0xc] sm:$0xf]
        %v831 = vld [vmem:[%s826 + $0x10] sm:$0xf]
        %v832 = vld [vmem:[%s826 + $0x14] sm:$0xf]
        %v833 = vld [vmem:[%s826 + $0x18] sm:$0xf]
        %v834 = vld [vmem:[%s826 + $0x1c] sm:$0xf]
        %v835 = vld [vmem:[%s826 + $0x20] sm:$0xf]
        %v836 = vld [vmem:[%s826 + $0x24] sm:$0xf]
        %v837 = vld [vmem:[%s826 + $0x28] sm:$0xf]
        %v838 = vld [vmem:[%s826 + $0x2c] sm:$0xf]
        %v839 = vld [vmem:[%s826 + $0x30] sm:$0xf]
        %v840 = vld [vmem:[%s826 + $0x34] sm:$0xf]
        %v841 = vld [vmem:[%s826 + $0x38] sm:$0xf]
        %v842 = vld [vmem:[%s826 + $0x3c] sm:$0xf]
        %v859 = vunpack.c.l.b16 %v827
        %v860 = vunpack.c.l.b16 %v828
        %v861 = vunpack.c.l.b16 %v829
        %v862 = vunpack.c.l.b16 %v830
        %v863 = vunpack.c.l.b16 %v831
        %v864 = vunpack.c.l.b16 %v832
        %v865 = vunpack.c.l.b16 %v833
        %v866 = vunpack.c.l.b16 %v834
        %v867 = vunpack.c.l.b16 %v835
        %v868 = vunpack.c.l.b16 %v836
        %v869 = vunpack.c.l.b16 %v837
        %v870 = vunpack.c.l.b16 %v838
        %v871 = vunpack.c.l.b16 %v839
        %v872 = vunpack.c.l.b16 %v840
        %v873 = vunpack.c.l.b16 %v841
        %v874 = vunpack.c.l.b16 %v842
        %v875 = vpack.c.b16 %v860, %v859
        %v876 = vpack.c.b16 %v862, %v861
        %v877 = vpack.c.b16 %v864, %v863
        %v878 = vpack.c.b16 %v866, %v865
        %v879 = vpack.c.b16 %v868, %v867
        %v880 = vpack.c.b16 %v870, %v869
        %v881 = vpack.c.b16 %v872, %v871
        %v882 = vpack.c.b16 %v874, %v873
        %891 = vmatpush.bf16.msra.mxu0 %v882
        %892 = vmatpush.bf16.msra.mxu0 %v881
        %893 = vmatpush.bf16.msra.mxu0 %v880
        %894 = vmatpush.bf16.msra.mxu0 %v879
        %895 = vmatpush.bf16.msra.mxu0 %v878
        %896 = vmatpush.bf16.msra.mxu0 %v877
        %897 = vmatpush.bf16.msra.mxu0 %v876
        %898 = vmatpush.bf16.msra.mxu0 %v875
        %899 = vmatmul.bf16.gmra.mxu0 %v818
        %v900 = vpop.f32.mrf.mxu0
        %v901 = vadd.f32 0.0, %v900
        %v902 = vpop.f32.mrf.mxu0
        %v903 = vadd.f32 0.0, %v902
        %904 = vmatmul.bf16.gmra.mxu0 %v819
        %v905 = vpop.f32.mrf.mxu0
        %v906 = vadd.f32 0.0, %v905
        %v907 = vpop.f32.mrf.mxu0
        %v908 = vadd.f32 0.0, %v907
        %909 = vmatmul.bf16.gmra.mxu0 %v820
        %v910 = vpop.f32.mrf.mxu0
        %v911 = vadd.f32 0.0, %v910
        %v912 = vpop.f32.mrf.mxu0
        %v913 = vadd.f32 0.0, %v912
        %914 = vmatmul.bf16.gmra.mxu0 %v821
        %v915 = vpop.f32.mrf.mxu0
        %v916 = vadd.f32 0.0, %v915
        %v917 = vpop.f32.mrf.mxu0
        %v918 = vadd.f32 0.0, %v917
        %919 = vmatmul.bf16.gmra.mxu0 %v822
        %v920 = vpop.f32.mrf.mxu0
        %v921 = vadd.f32 0.0, %v920
        %v922 = vpop.f32.mrf.mxu0
        %v923 = vadd.f32 0.0, %v922
        %924 = vmatmul.bf16.gmra.mxu0 %v823
        %v925 = vpop.f32.mrf.mxu0
        %v926 = vadd.f32 0.0, %v925
        %v927 = vpop.f32.mrf.mxu0
        %v928 = vadd.f32 0.0, %v927
        %929 = vmatmul.bf16.gmra.mxu0 %v824
        %v930 = vpop.f32.mrf.mxu0
        %v931 = vadd.f32 0.0, %v930
        %v932 = vpop.f32.mrf.mxu0
        %v933 = vadd.f32 0.0, %v932
        %934 = vmatmul.bf16.gmra.mxu0 %v825
        %v935 = vpop.f32.mrf.mxu0
        %v936 = vadd.f32 0.0, %v935
        %v937 = vpop.f32.mrf.mxu0
        %v938 = vadd.f32 0.0, %v937
        %939 = vdwg.mxu0
        %v940 = vmul.f32 %v901, 0.01
        %v941 = vmul.f32 %v903, 0.01
        %v942 = vmul.f32 %v906, 0.01
        %v943 = vmul.f32 %v908, 0.01
        %v944 = vmul.f32 %v911, 0.01
        %v945 = vmul.f32 %v913, 0.01
        %v946 = vmul.f32 %v916, 0.01
        %v947 = vmul.f32 %v918, 0.01
        %v948 = vmul.f32 %v921, 0.01
        %v949 = vmul.f32 %v923, 0.01
        %v950 = vmul.f32 %v926, 0.01
        %v951 = vmul.f32 %v928, 0.01
        %v952 = vmul.f32 %v931, 0.01
        %v953 = vmul.f32 %v933, 0.01
        %v954 = vmul.f32 %v936, 0.01
        %v955 = vmul.f32 %v938, 0.01
        %v956 = vmax.f32 %v901, %v940
        %v957 = vmax.f32 %v903, %v941
        %v958 = vmax.f32 %v906, %v942
        %v959 = vmax.f32 %v908, %v943
        %v960 = vmax.f32 %v911, %v944
        %v961 = vmax.f32 %v913, %v945
        %v962 = vmax.f32 %v916, %v946
        %v963 = vmax.f32 %v918, %v947
        %v964 = vmax.f32 %v921, %v948
        %v965 = vmax.f32 %v923, %v949
        %v966 = vmax.f32 %v926, %v950
        %v967 = vmax.f32 %v928, %v951
        %v968 = vmax.f32 %v931, %v952
        %v969 = vmax.f32 %v933, %v953
        %v970 = vmax.f32 %v936, %v954
        %v971 = vmax.f32 %v938, %v955
        %v972 = vpack.c.bf16 %v957, %v956
        %v973 = vpack.c.bf16 %v959, %v958
        %v974 = vpack.c.bf16 %v961, %v960
        %v975 = vpack.c.bf16 %v963, %v962
        %v976 = vpack.c.bf16 %v965, %v964
        %v977 = vpack.c.bf16 %v967, %v966
        %v978 = vpack.c.bf16 %v969, %v968
        %v979 = vpack.c.bf16 %v971, %v970
        %s980 = scalar_lea.vmem [#allocation2], 256
        %v981 = vld [vmem:[%s980] sm:$0xf]
        %v982 = vld [vmem:[%s980 + $0x4] sm:$0xf]
        %v983 = vld [vmem:[%s980 + $0x8] sm:$0xf]
        %v984 = vld [vmem:[%s980 + $0xc] sm:$0xf]
        %v985 = vld [vmem:[%s980 + $0x10] sm:$0xf]
        %v986 = vld [vmem:[%s980 + $0x14] sm:$0xf]
        %v987 = vld [vmem:[%s980 + $0x18] sm:$0xf]
        %v988 = vld [vmem:[%s980 + $0x1c] sm:$0xf]
        %v989 = vld [vmem:[%s980 + $0x20] sm:$0xf]
        %v990 = vld [vmem:[%s980 + $0x24] sm:$0xf]
        %v991 = vld [vmem:[%s980 + $0x28] sm:$0xf]
        %v992 = vld [vmem:[%s980 + $0x2c] sm:$0xf]
        %v993 = vld [vmem:[%s980 + $0x30] sm:$0xf]
        %v994 = vld [vmem:[%s980 + $0x34] sm:$0xf]
        %v995 = vld [vmem:[%s980 + $0x38] sm:$0xf]
        %v996 = vld [vmem:[%s980 + $0x3c] sm:$0xf]
        %v1013 = vunpack.c.l.b16 %v981
        %v1014 = vunpack.c.l.b16 %v982
        %v1015 = vunpack.c.l.b16 %v983
        %v1016 = vunpack.c.l.b16 %v984
        %v1017 = vunpack.c.l.b16 %v985
        %v1018 = vunpack.c.l.b16 %v986
        %v1019 = vunpack.c.l.b16 %v987
        %v1020 = vunpack.c.l.b16 %v988
        %v1021 = vunpack.c.l.b16 %v989
        %v1022 = vunpack.c.l.b16 %v990
        %v1023 = vunpack.c.l.b16 %v991
        %v1024 = vunpack.c.l.b16 %v992
        %v1025 = vunpack.c.l.b16 %v993
        %v1026 = vunpack.c.l.b16 %v994
        %v1027 = vunpack.c.l.b16 %v995
        %v1028 = vunpack.c.l.b16 %v996
        %v1029 = vpack.c.b16 %v1014, %v1013
        %v1030 = vpack.c.b16 %v1016, %v1015
        %v1031 = vpack.c.b16 %v1018, %v1017
        %v1032 = vpack.c.b16 %v1020, %v1019
        %v1033 = vpack.c.b16 %v1022, %v1021
        %v1034 = vpack.c.b16 %v1024, %v1023
        %v1035 = vpack.c.b16 %v1026, %v1025
        %v1036 = vpack.c.b16 %v1028, %v1027
        %1045 = vmatpush.bf16.msra.mxu0 %v1036
        %1046 = vmatpush.bf16.msra.mxu0 %v1035
        %1047 = vmatpush.bf16.msra.mxu0 %v1034
        %1048 = vmatpush.bf16.msra.mxu0 %v1033
        %1049 = vmatpush.bf16.msra.mxu0 %v1032
        %1050 = vmatpush.bf16.msra.mxu0 %v1031
        %1051 = vmatpush.bf16.msra.mxu0 %v1030
        %1052 = vmatpush.bf16.msra.mxu0 %v1029
        %1053 = vmatmul.bf16.gmra.mxu0 %v972
        %v1054 = vpop.f32.mrf.mxu0
        %v1055 = vadd.f32 0.0, %v1054
        %v1056 = vpop.f32.mrf.mxu0
        %v1057 = vadd.f32 0.0, %v1056
        %1058 = vmatmul.bf16.gmra.mxu0 %v973
        %v1059 = vpop.f32.mrf.mxu0
        %v1060 = vadd.f32 0.0, %v1059
        %v1061 = vpop.f32.mrf.mxu0
        %v1062 = vadd.f32 0.0, %v1061
        %1063 = vmatmul.bf16.gmra.mxu0 %v974
        %v1064 = vpop.f32.mrf.mxu0
        %v1065 = vadd.f32 0.0, %v1064
        %v1066 = vpop.f32.mrf.mxu0
        %v1067 = vadd.f32 0.0, %v1066
        %1068 = vmatmul.bf16.gmra.mxu0 %v975
        %v1069 = vpop.f32.mrf.mxu0
        %v1070 = vadd.f32 0.0, %v1069
        %v1071 = vpop.f32.mrf.mxu0
        %v1072 = vadd.f32 0.0, %v1071
        %1073 = vmatmul.bf16.gmra.mxu0 %v976
        %v1074 = vpop.f32.mrf.mxu0
        %v1075 = vadd.f32 0.0, %v1074
        %v1076 = vpop.f32.mrf.mxu0
        %v1077 = vadd.f32 0.0, %v1076
        %1078 = vmatmul.bf16.gmra.mxu0 %v977
        %v1079 = vpop.f32.mrf.mxu0
        %v1080 = vadd.f32 0.0, %v1079
        %v1081 = vpop.f32.mrf.mxu0
        %v1082 = vadd.f32 0.0, %v1081
        %1083 = vmatmul.bf16.gmra.mxu0 %v978
        %v1084 = vpop.f32.mrf.mxu0
        %v1085 = vadd.f32 0.0, %v1084
        %v1086 = vpop.f32.mrf.mxu0
        %v1087 = vadd.f32 0.0, %v1086
        %1088 = vmatmul.bf16.gmra.mxu0 %v979
        %v1089 = vpop.f32.mrf.mxu0
        %v1090 = vadd.f32 0.0, %v1089
        %v1091 = vpop.f32.mrf.mxu0
        %v1092 = vadd.f32 0.0, %v1091
        %1093 = vdwg.mxu0
        %v1094 = vmul.f32 %v1055, 0.01
        %v1095 = vmul.f32 %v1057, 0.01
        %v1096 = vmul.f32 %v1060, 0.01
        %v1097 = vmul.f32 %v1062, 0.01
        %v1098 = vmul.f32 %v1065, 0.01
        %v1099 = vmul.f32 %v1067, 0.01
        %v1100 = vmul.f32 %v1070, 0.01
        %v1101 = vmul.f32 %v1072, 0.01
        %v1102 = vmul.f32 %v1075, 0.01
        %v1103 = vmul.f32 %v1077, 0.01
        %v1104 = vmul.f32 %v1080, 0.01
        %v1105 = vmul.f32 %v1082, 0.01
        %v1106 = vmul.f32 %v1085, 0.01
        %v1107 = vmul.f32 %v1087, 0.01
        %v1108 = vmul.f32 %v1090, 0.01
        %v1109 = vmul.f32 %v1092, 0.01
        %v1110 = vmax.f32 %v1055, %v1094
        %v1111 = vmax.f32 %v1057, %v1095
        %v1112 = vmax.f32 %v1060, %v1096
        %v1113 = vmax.f32 %v1062, %v1097
        %v1114 = vmax.f32 %v1065, %v1098
        %v1115 = vmax.f32 %v1067, %v1099
        %v1116 = vmax.f32 %v1070, %v1100
        %v1117 = vmax.f32 %v1072, %v1101
        %v1118 = vmax.f32 %v1075, %v1102
        %v1119 = vmax.f32 %v1077, %v1103
        %v1120 = vmax.f32 %v1080, %v1104
        %v1121 = vmax.f32 %v1082, %v1105
        %v1122 = vmax.f32 %v1085, %v1106
        %v1123 = vmax.f32 %v1087, %v1107
        %v1124 = vmax.f32 %v1090, %v1108
        %v1125 = vmax.f32 %v1092, %v1109
        %v1126 = vpack.c.bf16 %v1111, %v1110
        %v1127 = vpack.c.bf16 %v1113, %v1112
        %v1128 = vpack.c.bf16 %v1115, %v1114
        %v1129 = vpack.c.bf16 %v1117, %v1116
        %v1130 = vpack.c.bf16 %v1119, %v1118
        %v1131 = vpack.c.bf16 %v1121, %v1120
        %v1132 = vpack.c.bf16 %v1123, %v1122
        %v1133 = vpack.c.bf16 %v1125, %v1124
        %s1134 = scalar_lea.vmem [#allocation2], 320
        %v1135 = vld [vmem:[%s1134] sm:$0xf]
        %v1136 = vld [vmem:[%s1134 + $0x4] sm:$0xf]
        %v1137 = vld [vmem:[%s1134 + $0x8] sm:$0xf]
        %v1138 = vld [vmem:[%s1134 + $0xc] sm:$0xf]
        %v1139 = vld [vmem:[%s1134 + $0x10] sm:$0xf]
        %v1140 = vld [vmem:[%s1134 + $0x14] sm:$0xf]
        %v1141 = vld [vmem:[%s1134 + $0x18] sm:$0xf]
        %v1142 = vld [vmem:[%s1134 + $0x1c] sm:$0xf]
        %v1143 = vld [vmem:[%s1134 + $0x20] sm:$0xf]
        %v1144 = vld [vmem:[%s1134 + $0x24] sm:$0xf]
        %v1145 = vld [vmem:[%s1134 + $0x28] sm:$0xf]
        %v1146 = vld [vmem:[%s1134 + $0x2c] sm:$0xf]
        %v1147 = vld [vmem:[%s1134 + $0x30] sm:$0xf]
        %v1148 = vld [vmem:[%s1134 + $0x34] sm:$0xf]
        %v1149 = vld [vmem:[%s1134 + $0x38] sm:$0xf]
        %v1150 = vld [vmem:[%s1134 + $0x3c] sm:$0xf]
        %v1167 = vunpack.c.l.b16 %v1135
        %v1168 = vunpack.c.l.b16 %v1136
        %v1169 = vunpack.c.l.b16 %v1137
        %v1170 = vunpack.c.l.b16 %v1138
        %v1171 = vunpack.c.l.b16 %v1139
        %v1172 = vunpack.c.l.b16 %v1140
        %v1173 = vunpack.c.l.b16 %v1141
        %v1174 = vunpack.c.l.b16 %v1142
        %v1175 = vunpack.c.l.b16 %v1143
        %v1176 = vunpack.c.l.b16 %v1144
        %v1177 = vunpack.c.l.b16 %v1145
        %v1178 = vunpack.c.l.b16 %v1146
        %v1179 = vunpack.c.l.b16 %v1147
        %v1180 = vunpack.c.l.b16 %v1148
        %v1181 = vunpack.c.l.b16 %v1149
        %v1182 = vunpack.c.l.b16 %v1150
        %v1183 = vpack.c.b16 %v1168, %v1167
        %v1184 = vpack.c.b16 %v1170, %v1169
        %v1185 = vpack.c.b16 %v1172, %v1171
        %v1186 = vpack.c.b16 %v1174, %v1173
        %v1187 = vpack.c.b16 %v1176, %v1175
        %v1188 = vpack.c.b16 %v1178, %v1177
        %v1189 = vpack.c.b16 %v1180, %v1179
        %v1190 = vpack.c.b16 %v1182, %v1181
        %1199 = vmatpush.bf16.msra.mxu0 %v1190
        %1200 = vmatpush.bf16.msra.mxu0 %v1189
        %1201 = vmatpush.bf16.msra.mxu0 %v1188
        %1202 = vmatpush.bf16.msra.mxu0 %v1187
        %1203 = vmatpush.bf16.msra.mxu0 %v1186
        %1204 = vmatpush.bf16.msra.mxu0 %v1185
        %1205 = vmatpush.bf16.msra.mxu0 %v1184
        %1206 = vmatpush.bf16.msra.mxu0 %v1183
        %1207 = vmatmul.bf16.gmra.mxu0 %v1126
        %v1208 = vpop.f32.mrf.mxu0
        %v1209 = vadd.f32 0.0, %v1208
        %v1210 = vpop.f32.mrf.mxu0
        %v1211 = vadd.f32 0.0, %v1210
        %1212 = vmatmul.bf16.gmra.mxu0 %v1127
        %v1213 = vpop.f32.mrf.mxu0
        %v1214 = vadd.f32 0.0, %v1213
        %v1215 = vpop.f32.mrf.mxu0
        %v1216 = vadd.f32 0.0, %v1215
        %1217 = vmatmul.bf16.gmra.mxu0 %v1128
        %v1218 = vpop.f32.mrf.mxu0
        %v1219 = vadd.f32 0.0, %v1218
        %v1220 = vpop.f32.mrf.mxu0
        %v1221 = vadd.f32 0.0, %v1220
        %1222 = vmatmul.bf16.gmra.mxu0 %v1129
        %v1223 = vpop.f32.mrf.mxu0
        %v1224 = vadd.f32 0.0, %v1223
        %v1225 = vpop.f32.mrf.mxu0
        %v1226 = vadd.f32 0.0, %v1225
        %1227 = vmatmul.bf16.gmra.mxu0 %v1130
        %v1228 = vpop.f32.mrf.mxu0
        %v1229 = vadd.f32 0.0, %v1228
        %v1230 = vpop.f32.mrf.mxu0
        %v1231 = vadd.f32 0.0, %v1230
        %1232 = vmatmul.bf16.gmra.mxu0 %v1131
        %v1233 = vpop.f32.mrf.mxu0
        %v1234 = vadd.f32 0.0, %v1233
        %v1235 = vpop.f32.mrf.mxu0
        %v1236 = vadd.f32 0.0, %v1235
        %1237 = vmatmul.bf16.gmra.mxu0 %v1132
        %v1238 = vpop.f32.mrf.mxu0
        %v1239 = vadd.f32 0.0, %v1238
        %v1240 = vpop.f32.mrf.mxu0
        %v1241 = vadd.f32 0.0, %v1240
        %1242 = vmatmul.bf16.gmra.mxu0 %v1133
        %v1243 = vpop.f32.mrf.mxu0
        %v1244 = vadd.f32 0.0, %v1243
        %v1245 = vpop.f32.mrf.mxu0
        %v1246 = vadd.f32 0.0, %v1245
        %1247 = vdwg.mxu0
        %v1248 = vmul.f32 %v1209, 0.01
        %v1249 = vmul.f32 %v1211, 0.01
        %v1250 = vmul.f32 %v1214, 0.01
        %v1251 = vmul.f32 %v1216, 0.01
        %v1252 = vmul.f32 %v1219, 0.01
        %v1253 = vmul.f32 %v1221, 0.01
        %v1254 = vmul.f32 %v1224, 0.01
        %v1255 = vmul.f32 %v1226, 0.01
        %v1256 = vmul.f32 %v1229, 0.01
        %v1257 = vmul.f32 %v1231, 0.01
        %v1258 = vmul.f32 %v1234, 0.01
        %v1259 = vmul.f32 %v1236, 0.01
        %v1260 = vmul.f32 %v1239, 0.01
        %v1261 = vmul.f32 %v1241, 0.01
        %v1262 = vmul.f32 %v1244, 0.01
        %v1263 = vmul.f32 %v1246, 0.01
        %v1264 = vmax.f32 %v1209, %v1248
        %v1265 = vmax.f32 %v1211, %v1249
        %v1266 = vmax.f32 %v1214, %v1250
        %v1267 = vmax.f32 %v1216, %v1251
        %v1268 = vmax.f32 %v1219, %v1252
        %v1269 = vmax.f32 %v1221, %v1253
        %v1270 = vmax.f32 %v1224, %v1254
        %v1271 = vmax.f32 %v1226, %v1255
        %v1272 = vmax.f32 %v1229, %v1256
        %v1273 = vmax.f32 %v1231, %v1257
        %v1274 = vmax.f32 %v1234, %v1258
        %v1275 = vmax.f32 %v1236, %v1259
        %v1276 = vmax.f32 %v1239, %v1260
        %v1277 = vmax.f32 %v1241, %v1261
        %v1278 = vmax.f32 %v1244, %v1262
        %v1279 = vmax.f32 %v1246, %v1263
        %v1280 = vpack.c.bf16 %v1265, %v1264
        %v1281 = vpack.c.bf16 %v1267, %v1266
        %v1282 = vpack.c.bf16 %v1269, %v1268
        %v1283 = vpack.c.bf16 %v1271, %v1270
        %v1284 = vpack.c.bf16 %v1273, %v1272
        %v1285 = vpack.c.bf16 %v1275, %v1274
        %v1286 = vpack.c.bf16 %v1277, %v1276
        %v1287 = vpack.c.bf16 %v1279, %v1278
        %s1288 = scalar_lea.vmem [#allocation2], 384
        %v1289 = vld [vmem:[%s1288] sm:$0xf]
        %v1290 = vld [vmem:[%s1288 + $0x4] sm:$0xf]
        %v1291 = vld [vmem:[%s1288 + $0x8] sm:$0xf]
        %v1292 = vld [vmem:[%s1288 + $0xc] sm:$0xf]
        %v1293 = vld [vmem:[%s1288 + $0x10] sm:$0xf]
        %v1294 = vld [vmem:[%s1288 + $0x14] sm:$0xf]
        %v1295 = vld [vmem:[%s1288 + $0x18] sm:$0xf]
        %v1296 = vld [vmem:[%s1288 + $0x1c] sm:$0xf]
        %v1297 = vld [vmem:[%s1288 + $0x20] sm:$0xf]
        %v1298 = vld [vmem:[%s1288 + $0x24] sm:$0xf]
        %v1299 = vld [vmem:[%s1288 + $0x28] sm:$0xf]
        %v1300 = vld [vmem:[%s1288 + $0x2c] sm:$0xf]
        %v1301 = vld [vmem:[%s1288 + $0x30] sm:$0xf]
        %v1302 = vld [vmem:[%s1288 + $0x34] sm:$0xf]
        %v1303 = vld [vmem:[%s1288 + $0x38] sm:$0xf]
        %v1304 = vld [vmem:[%s1288 + $0x3c] sm:$0xf]
        %v1321 = vunpack.c.l.b16 %v1289
        %v1322 = vunpack.c.l.b16 %v1290
        %v1323 = vunpack.c.l.b16 %v1291
        %v1324 = vunpack.c.l.b16 %v1292
        %v1325 = vunpack.c.l.b16 %v1293
        %v1326 = vunpack.c.l.b16 %v1294
        %v1327 = vunpack.c.l.b16 %v1295
        %v1328 = vunpack.c.l.b16 %v1296
        %v1329 = vunpack.c.l.b16 %v1297
        %v1330 = vunpack.c.l.b16 %v1298
        %v1331 = vunpack.c.l.b16 %v1299
        %v1332 = vunpack.c.l.b16 %v1300
        %v1333 = vunpack.c.l.b16 %v1301
        %v1334 = vunpack.c.l.b16 %v1302
        %v1335 = vunpack.c.l.b16 %v1303
        %v1336 = vunpack.c.l.b16 %v1304
        %v1337 = vpack.c.b16 %v1322, %v1321
        %v1338 = vpack.c.b16 %v1324, %v1323
        %v1339 = vpack.c.b16 %v1326, %v1325
        %v1340 = vpack.c.b16 %v1328, %v1327
        %v1341 = vpack.c.b16 %v1330, %v1329
        %v1342 = vpack.c.b16 %v1332, %v1331
        %v1343 = vpack.c.b16 %v1334, %v1333
        %v1344 = vpack.c.b16 %v1336, %v1335
        %1353 = vmatpush.bf16.msra.mxu0 %v1344
        %1354 = vmatpush.bf16.msra.mxu0 %v1343
        %1355 = vmatpush.bf16.msra.mxu0 %v1342
        %1356 = vmatpush.bf16.msra.mxu0 %v1341
        %1357 = vmatpush.bf16.msra.mxu0 %v1340
        %1358 = vmatpush.bf16.msra.mxu0 %v1339
        %1359 = vmatpush.bf16.msra.mxu0 %v1338
        %1360 = vmatpush.bf16.msra.mxu0 %v1337
        %1361 = vmatmul.bf16.gmra.mxu0 %v1280
        %v1362 = vpop.f32.mrf.mxu0
        %v1363 = vadd.f32 0.0, %v1362
        %v1364 = vpop.f32.mrf.mxu0
        %v1365 = vadd.f32 0.0, %v1364
        %1366 = vmatmul.bf16.gmra.mxu0 %v1281
        %v1367 = vpop.f32.mrf.mxu0
        %v1368 = vadd.f32 0.0, %v1367
        %v1369 = vpop.f32.mrf.mxu0
        %v1370 = vadd.f32 0.0, %v1369
        %1371 = vmatmul.bf16.gmra.mxu0 %v1282
        %v1372 = vpop.f32.mrf.mxu0
        %v1373 = vadd.f32 0.0, %v1372
        %v1374 = vpop.f32.mrf.mxu0
        %v1375 = vadd.f32 0.0, %v1374
        %1376 = vmatmul.bf16.gmra.mxu0 %v1283
        %v1377 = vpop.f32.mrf.mxu0
        %v1378 = vadd.f32 0.0, %v1377
        %v1379 = vpop.f32.mrf.mxu0
        %v1380 = vadd.f32 0.0, %v1379
        %1381 = vmatmul.bf16.gmra.mxu0 %v1284
        %v1382 = vpop.f32.mrf.mxu0
        %v1383 = vadd.f32 0.0, %v1382
        %v1384 = vpop.f32.mrf.mxu0
        %v1385 = vadd.f32 0.0, %v1384
        %1386 = vmatmul.bf16.gmra.mxu0 %v1285
        %v1387 = vpop.f32.mrf.mxu0
        %v1388 = vadd.f32 0.0, %v1387
        %v1389 = vpop.f32.mrf.mxu0
        %v1390 = vadd.f32 0.0, %v1389
        %1391 = vmatmul.bf16.gmra.mxu0 %v1286
        %v1392 = vpop.f32.mrf.mxu0
        %v1393 = vadd.f32 0.0, %v1392
        %v1394 = vpop.f32.mrf.mxu0
        %v1395 = vadd.f32 0.0, %v1394
        %1396 = vmatmul.bf16.gmra.mxu0 %v1287
        %v1397 = vpop.f32.mrf.mxu0
        %v1398 = vadd.f32 0.0, %v1397
        %v1399 = vpop.f32.mrf.mxu0
        %v1400 = vadd.f32 0.0, %v1399
        %1401 = vdwg.mxu0
        %v1402 = vmul.f32 %v1363, 0.01
        %v1403 = vmul.f32 %v1365, 0.01
        %v1404 = vmul.f32 %v1368, 0.01
        %v1405 = vmul.f32 %v1370, 0.01
        %v1406 = vmul.f32 %v1373, 0.01
        %v1407 = vmul.f32 %v1375, 0.01
        %v1408 = vmul.f32 %v1378, 0.01
        %v1409 = vmul.f32 %v1380, 0.01
        %v1410 = vmul.f32 %v1383, 0.01
        %v1411 = vmul.f32 %v1385, 0.01
        %v1412 = vmul.f32 %v1388, 0.01
        %v1413 = vmul.f32 %v1390, 0.01
        %v1414 = vmul.f32 %v1393, 0.01
        %v1415 = vmul.f32 %v1395, 0.01
        %v1416 = vmul.f32 %v1398, 0.01
        %v1417 = vmul.f32 %v1400, 0.01
        %v1418 = vmax.f32 %v1363, %v1402
        %v1419 = vmax.f32 %v1365, %v1403
        %v1420 = vmax.f32 %v1368, %v1404
        %v1421 = vmax.f32 %v1370, %v1405
        %v1422 = vmax.f32 %v1373, %v1406
        %v1423 = vmax.f32 %v1375, %v1407
        %v1424 = vmax.f32 %v1378, %v1408
        %v1425 = vmax.f32 %v1380, %v1409
        %v1426 = vmax.f32 %v1383, %v1410
        %v1427 = vmax.f32 %v1385, %v1411
        %v1428 = vmax.f32 %v1388, %v1412
        %v1429 = vmax.f32 %v1390, %v1413
        %v1430 = vmax.f32 %v1393, %v1414
        %v1431 = vmax.f32 %v1395, %v1415
        %v1432 = vmax.f32 %v1398, %v1416
        %v1433 = vmax.f32 %v1400, %v1417
        %v1434 = vpack.c.bf16 %v1419, %v1418
        %v1435 = vpack.c.bf16 %v1421, %v1420
        %v1436 = vpack.c.bf16 %v1423, %v1422
        %v1437 = vpack.c.bf16 %v1425, %v1424
        %v1438 = vpack.c.bf16 %v1427, %v1426
        %v1439 = vpack.c.bf16 %v1429, %v1428
        %v1440 = vpack.c.bf16 %v1431, %v1430
        %v1441 = vpack.c.bf16 %v1433, %v1432
        %s1442 = scalar_lea.vmem [#allocation2], 448
        %v1443 = vld [vmem:[%s1442] sm:$0xf]
        %v1444 = vld [vmem:[%s1442 + $0x4] sm:$0xf]
        %v1445 = vld [vmem:[%s1442 + $0x8] sm:$0xf]
        %v1446 = vld [vmem:[%s1442 + $0xc] sm:$0xf]
        %v1447 = vld [vmem:[%s1442 + $0x10] sm:$0xf]
        %v1448 = vld [vmem:[%s1442 + $0x14] sm:$0xf]
        %v1449 = vld [vmem:[%s1442 + $0x18] sm:$0xf]
        %v1450 = vld [vmem:[%s1442 + $0x1c] sm:$0xf]
        %v1451 = vld [vmem:[%s1442 + $0x20] sm:$0xf]
        %v1452 = vld [vmem:[%s1442 + $0x24] sm:$0xf]
        %v1453 = vld [vmem:[%s1442 + $0x28] sm:$0xf]
        %v1454 = vld [vmem:[%s1442 + $0x2c] sm:$0xf]
        %v1455 = vld [vmem:[%s1442 + $0x30] sm:$0xf]
        %v1456 = vld [vmem:[%s1442 + $0x34] sm:$0xf]
        %v1457 = vld [vmem:[%s1442 + $0x38] sm:$0xf]
        %v1458 = vld [vmem:[%s1442 + $0x3c] sm:$0xf]
        %v1475 = vunpack.c.l.b16 %v1443
        %v1476 = vunpack.c.l.b16 %v1444
        %v1477 = vunpack.c.l.b16 %v1445
        %v1478 = vunpack.c.l.b16 %v1446
        %v1479 = vunpack.c.l.b16 %v1447
        %v1480 = vunpack.c.l.b16 %v1448
        %v1481 = vunpack.c.l.b16 %v1449
        %v1482 = vunpack.c.l.b16 %v1450
        %v1483 = vunpack.c.l.b16 %v1451
        %v1484 = vunpack.c.l.b16 %v1452
        %v1485 = vunpack.c.l.b16 %v1453
        %v1486 = vunpack.c.l.b16 %v1454
        %v1487 = vunpack.c.l.b16 %v1455
        %v1488 = vunpack.c.l.b16 %v1456
        %v1489 = vunpack.c.l.b16 %v1457
        %v1490 = vunpack.c.l.b16 %v1458
        %v1491 = vpack.c.b16 %v1476, %v1475
        %v1492 = vpack.c.b16 %v1478, %v1477
        %v1493 = vpack.c.b16 %v1480, %v1479
        %v1494 = vpack.c.b16 %v1482, %v1481
        %v1495 = vpack.c.b16 %v1484, %v1483
        %v1496 = vpack.c.b16 %v1486, %v1485
        %v1497 = vpack.c.b16 %v1488, %v1487
        %v1498 = vpack.c.b16 %v1490, %v1489
        %1507 = vmatpush.bf16.msra.mxu0 %v1498
        %1508 = vmatpush.bf16.msra.mxu0 %v1497
        %1509 = vmatpush.bf16.msra.mxu0 %v1496
        %1510 = vmatpush.bf16.msra.mxu0 %v1495
        %1511 = vmatpush.bf16.msra.mxu0 %v1494
        %1512 = vmatpush.bf16.msra.mxu0 %v1493
        %1513 = vmatpush.bf16.msra.mxu0 %v1492
        %1514 = vmatpush.bf16.msra.mxu0 %v1491
        %1515 = vmatmul.bf16.gmra.mxu0 %v1434
        %v1516 = vpop.f32.mrf.mxu0
        %v1517 = vadd.f32 0.0, %v1516
        %v1518 = vpop.f32.mrf.mxu0
        %v1519 = vadd.f32 0.0, %v1518
        %1520 = vmatmul.bf16.gmra.mxu0 %v1435
        %v1521 = vpop.f32.mrf.mxu0
        %v1522 = vadd.f32 0.0, %v1521
        %v1523 = vpop.f32.mrf.mxu0
        %v1524 = vadd.f32 0.0, %v1523
        %1525 = vmatmul.bf16.gmra.mxu0 %v1436
        %v1526 = vpop.f32.mrf.mxu0
        %v1527 = vadd.f32 0.0, %v1526
        %v1528 = vpop.f32.mrf.mxu0
        %v1529 = vadd.f32 0.0, %v1528
        %1530 = vmatmul.bf16.gmra.mxu0 %v1437
        %v1531 = vpop.f32.mrf.mxu0
        %v1532 = vadd.f32 0.0, %v1531
        %v1533 = vpop.f32.mrf.mxu0
        %v1534 = vadd.f32 0.0, %v1533
        %1535 = vmatmul.bf16.gmra.mxu0 %v1438
        %v1536 = vpop.f32.mrf.mxu0
        %v1537 = vadd.f32 0.0, %v1536
        %v1538 = vpop.f32.mrf.mxu0
        %v1539 = vadd.f32 0.0, %v1538
        %1540 = vmatmul.bf16.gmra.mxu0 %v1439
        %v1541 = vpop.f32.mrf.mxu0
        %v1542 = vadd.f32 0.0, %v1541
        %v1543 = vpop.f32.mrf.mxu0
        %v1544 = vadd.f32 0.0, %v1543
        %1545 = vmatmul.bf16.gmra.mxu0 %v1440
        %v1546 = vpop.f32.mrf.mxu0
        %v1547 = vadd.f32 0.0, %v1546
        %v1548 = vpop.f32.mrf.mxu0
        %v1549 = vadd.f32 0.0, %v1548
        %1550 = vmatmul.bf16.gmra.mxu0 %v1441
        %v1551 = vpop.f32.mrf.mxu0
        %v1552 = vadd.f32 0.0, %v1551
        %v1553 = vpop.f32.mrf.mxu0
        %v1554 = vadd.f32 0.0, %v1553
        %1555 = vdwg.mxu0
        %v1556 = vmul.f32 %v1517, 0.01
        %v1557 = vmul.f32 %v1519, 0.01
        %v1558 = vmul.f32 %v1522, 0.01
        %v1559 = vmul.f32 %v1524, 0.01
        %v1560 = vmul.f32 %v1527, 0.01
        %v1561 = vmul.f32 %v1529, 0.01
        %v1562 = vmul.f32 %v1532, 0.01
        %v1563 = vmul.f32 %v1534, 0.01
        %v1564 = vmul.f32 %v1537, 0.01
        %v1565 = vmul.f32 %v1539, 0.01
        %v1566 = vmul.f32 %v1542, 0.01
        %v1567 = vmul.f32 %v1544, 0.01
        %v1568 = vmul.f32 %v1547, 0.01
        %v1569 = vmul.f32 %v1549, 0.01
        %v1570 = vmul.f32 %v1552, 0.01
        %v1571 = vmul.f32 %v1554, 0.01
        %v1572 = vmax.f32 %v1517, %v1556
        %v1573 = vmax.f32 %v1519, %v1557
        %v1574 = vmax.f32 %v1522, %v1558
        %v1575 = vmax.f32 %v1524, %v1559
        %v1576 = vmax.f32 %v1527, %v1560
        %v1577 = vmax.f32 %v1529, %v1561
        %v1578 = vmax.f32 %v1532, %v1562
        %v1579 = vmax.f32 %v1534, %v1563
        %v1580 = vmax.f32 %v1537, %v1564
        %v1581 = vmax.f32 %v1539, %v1565
        %v1582 = vmax.f32 %v1542, %v1566
        %v1583 = vmax.f32 %v1544, %v1567
        %v1584 = vmax.f32 %v1547, %v1568
        %v1585 = vmax.f32 %v1549, %v1569
        %v1586 = vmax.f32 %v1552, %v1570
        %v1587 = vmax.f32 %v1554, %v1571
        %v1588 = vpack.c.bf16 %v1573, %v1572
        %v1589 = vpack.c.bf16 %v1575, %v1574
        %v1590 = vpack.c.bf16 %v1577, %v1576
        %v1591 = vpack.c.bf16 %v1579, %v1578
        %v1592 = vpack.c.bf16 %v1581, %v1580
        %v1593 = vpack.c.bf16 %v1583, %v1582
        %v1594 = vpack.c.bf16 %v1585, %v1584
        %v1595 = vpack.c.bf16 %v1587, %v1586
        %s1596 = scalar_lea.vmem [#allocation2], 512
        %v1597 = vld [vmem:[%s1596] sm:$0xf]
        %v1598 = vld [vmem:[%s1596 + $0x4] sm:$0xf]
        %v1599 = vld [vmem:[%s1596 + $0x8] sm:$0xf]
        %v1600 = vld [vmem:[%s1596 + $0xc] sm:$0xf]
        %v1601 = vld [vmem:[%s1596 + $0x10] sm:$0xf]
        %v1602 = vld [vmem:[%s1596 + $0x14] sm:$0xf]
        %v1603 = vld [vmem:[%s1596 + $0x18] sm:$0xf]
        %v1604 = vld [vmem:[%s1596 + $0x1c] sm:$0xf]
        %v1605 = vld [vmem:[%s1596 + $0x20] sm:$0xf]
        %v1606 = vld [vmem:[%s1596 + $0x24] sm:$0xf]
        %v1607 = vld [vmem:[%s1596 + $0x28] sm:$0xf]
        %v1608 = vld [vmem:[%s1596 + $0x2c] sm:$0xf]
        %v1609 = vld [vmem:[%s1596 + $0x30] sm:$0xf]
        %v1610 = vld [vmem:[%s1596 + $0x34] sm:$0xf]
        %v1611 = vld [vmem:[%s1596 + $0x38] sm:$0xf]
        %v1612 = vld [vmem:[%s1596 + $0x3c] sm:$0xf]
        %v1629 = vunpack.c.l.b16 %v1597
        %v1630 = vunpack.c.l.b16 %v1598
        %v1631 = vunpack.c.l.b16 %v1599
        %v1632 = vunpack.c.l.b16 %v1600
        %v1633 = vunpack.c.l.b16 %v1601
        %v1634 = vunpack.c.l.b16 %v1602
        %v1635 = vunpack.c.l.b16 %v1603
        %v1636 = vunpack.c.l.b16 %v1604
        %v1637 = vunpack.c.l.b16 %v1605
        %v1638 = vunpack.c.l.b16 %v1606
        %v1639 = vunpack.c.l.b16 %v1607
        %v1640 = vunpack.c.l.b16 %v1608
        %v1641 = vunpack.c.l.b16 %v1609
        %v1642 = vunpack.c.l.b16 %v1610
        %v1643 = vunpack.c.l.b16 %v1611
        %v1644 = vunpack.c.l.b16 %v1612
        %v1645 = vpack.c.b16 %v1630, %v1629
        %v1646 = vpack.c.b16 %v1632, %v1631
        %v1647 = vpack.c.b16 %v1634, %v1633
        %v1648 = vpack.c.b16 %v1636, %v1635
        %v1649 = vpack.c.b16 %v1638, %v1637
        %v1650 = vpack.c.b16 %v1640, %v1639
        %v1651 = vpack.c.b16 %v1642, %v1641
        %v1652 = vpack.c.b16 %v1644, %v1643
        %1661 = vmatpush.bf16.msra.mxu0 %v1652
        %1662 = vmatpush.bf16.msra.mxu0 %v1651
        %1663 = vmatpush.bf16.msra.mxu0 %v1650
        %1664 = vmatpush.bf16.msra.mxu0 %v1649
        %1665 = vmatpush.bf16.msra.mxu0 %v1648
        %1666 = vmatpush.bf16.msra.mxu0 %v1647
        %1667 = vmatpush.bf16.msra.mxu0 %v1646
        %1668 = vmatpush.bf16.msra.mxu0 %v1645
        %1669 = vmatmul.bf16.gmra.mxu0 %v1588
        %v1670 = vpop.f32.mrf.mxu0
        %v1671 = vadd.f32 0.0, %v1670
        %v1672 = vpop.f32.mrf.mxu0
        %v1673 = vadd.f32 0.0, %v1672
        %1674 = vmatmul.bf16.gmra.mxu0 %v1589
        %v1675 = vpop.f32.mrf.mxu0
        %v1676 = vadd.f32 0.0, %v1675
        %v1677 = vpop.f32.mrf.mxu0
        %v1678 = vadd.f32 0.0, %v1677
        %1679 = vmatmul.bf16.gmra.mxu0 %v1590
        %v1680 = vpop.f32.mrf.mxu0
        %v1681 = vadd.f32 0.0, %v1680
        %v1682 = vpop.f32.mrf.mxu0
        %v1683 = vadd.f32 0.0, %v1682
        %1684 = vmatmul.bf16.gmra.mxu0 %v1591
        %v1685 = vpop.f32.mrf.mxu0
        %v1686 = vadd.f32 0.0, %v1685
        %v1687 = vpop.f32.mrf.mxu0
        %v1688 = vadd.f32 0.0, %v1687
        %1689 = vmatmul.bf16.gmra.mxu0 %v1592
        %v1690 = vpop.f32.mrf.mxu0
        %v1691 = vadd.f32 0.0, %v1690
        %v1692 = vpop.f32.mrf.mxu0
        %v1693 = vadd.f32 0.0, %v1692
        %1694 = vmatmul.bf16.gmra.mxu0 %v1593
        %v1695 = vpop.f32.mrf.mxu0
        %v1696 = vadd.f32 0.0, %v1695
        %v1697 = vpop.f32.mrf.mxu0
        %v1698 = vadd.f32 0.0, %v1697
        %1699 = vmatmul.bf16.gmra.mxu0 %v1594
        %v1700 = vpop.f32.mrf.mxu0
        %v1701 = vadd.f32 0.0, %v1700
        %v1702 = vpop.f32.mrf.mxu0
        %v1703 = vadd.f32 0.0, %v1702
        %1704 = vmatmul.bf16.gmra.mxu0 %v1595
        %v1705 = vpop.f32.mrf.mxu0
        %v1706 = vadd.f32 0.0, %v1705
        %v1707 = vpop.f32.mrf.mxu0
        %v1708 = vadd.f32 0.0, %v1707
        %1709 = vdwg.mxu0
        %v1710 = vmul.f32 %v1671, 0.01
        %v1711 = vmul.f32 %v1673, 0.01
        %v1712 = vmul.f32 %v1676, 0.01
        %v1713 = vmul.f32 %v1678, 0.01
        %v1714 = vmul.f32 %v1681, 0.01
        %v1715 = vmul.f32 %v1683, 0.01
        %v1716 = vmul.f32 %v1686, 0.01
        %v1717 = vmul.f32 %v1688, 0.01
        %v1718 = vmul.f32 %v1691, 0.01
        %v1719 = vmul.f32 %v1693, 0.01
        %v1720 = vmul.f32 %v1696, 0.01
        %v1721 = vmul.f32 %v1698, 0.01
        %v1722 = vmul.f32 %v1701, 0.01
        %v1723 = vmul.f32 %v1703, 0.01
        %v1724 = vmul.f32 %v1706, 0.01
        %v1725 = vmul.f32 %v1708, 0.01
        %v1726 = vmax.f32 %v1671, %v1710
        %v1727 = vmax.f32 %v1673, %v1711
        %v1728 = vmax.f32 %v1676, %v1712
        %v1729 = vmax.f32 %v1678, %v1713
        %v1730 = vmax.f32 %v1681, %v1714
        %v1731 = vmax.f32 %v1683, %v1715
        %v1732 = vmax.f32 %v1686, %v1716
        %v1733 = vmax.f32 %v1688, %v1717
        %v1734 = vmax.f32 %v1691, %v1718
        %v1735 = vmax.f32 %v1693, %v1719
        %v1736 = vmax.f32 %v1696, %v1720
        %v1737 = vmax.f32 %v1698, %v1721
        %v1738 = vmax.f32 %v1701, %v1722
        %v1739 = vmax.f32 %v1703, %v1723
        %v1740 = vmax.f32 %v1706, %v1724
        %v1741 = vmax.f32 %v1708, %v1725
        %v1742 = vpack.c.bf16 %v1727, %v1726
        %v1743 = vpack.c.bf16 %v1729, %v1728
        %v1744 = vpack.c.bf16 %v1731, %v1730
        %v1745 = vpack.c.bf16 %v1733, %v1732
        %v1746 = vpack.c.bf16 %v1735, %v1734
        %v1747 = vpack.c.bf16 %v1737, %v1736
        %v1748 = vpack.c.bf16 %v1739, %v1738
        %v1749 = vpack.c.bf16 %v1741, %v1740
        %s1750 = scalar_lea.vmem [#allocation2], 576
        %v1751 = vld [vmem:[%s1750] sm:$0xf]
        %v1752 = vld [vmem:[%s1750 + $0x4] sm:$0xf]
        %v1753 = vld [vmem:[%s1750 + $0x8] sm:$0xf]
        %v1754 = vld [vmem:[%s1750 + $0xc] sm:$0xf]
        %v1755 = vld [vmem:[%s1750 + $0x10] sm:$0xf]
        %v1756 = vld [vmem:[%s1750 + $0x14] sm:$0xf]
        %v1757 = vld [vmem:[%s1750 + $0x18] sm:$0xf]
        %v1758 = vld [vmem:[%s1750 + $0x1c] sm:$0xf]
        %v1759 = vld [vmem:[%s1750 + $0x20] sm:$0xf]
        %v1760 = vld [vmem:[%s1750 + $0x24] sm:$0xf]
        %v1761 = vld [vmem:[%s1750 + $0x28] sm:$0xf]
        %v1762 = vld [vmem:[%s1750 + $0x2c] sm:$0xf]
        %v1763 = vld [vmem:[%s1750 + $0x30] sm:$0xf]
        %v1764 = vld [vmem:[%s1750 + $0x34] sm:$0xf]
        %v1765 = vld [vmem:[%s1750 + $0x38] sm:$0xf]
        %v1766 = vld [vmem:[%s1750 + $0x3c] sm:$0xf]
        %v1783 = vunpack.c.l.b16 %v1751
        %v1784 = vunpack.c.l.b16 %v1752
        %v1785 = vunpack.c.l.b16 %v1753
        %v1786 = vunpack.c.l.b16 %v1754
        %v1787 = vunpack.c.l.b16 %v1755
        %v1788 = vunpack.c.l.b16 %v1756
        %v1789 = vunpack.c.l.b16 %v1757
        %v1790 = vunpack.c.l.b16 %v1758
        %v1791 = vunpack.c.l.b16 %v1759
        %v1792 = vunpack.c.l.b16 %v1760
        %v1793 = vunpack.c.l.b16 %v1761
        %v1794 = vunpack.c.l.b16 %v1762
        %v1795 = vunpack.c.l.b16 %v1763
        %v1796 = vunpack.c.l.b16 %v1764
        %v1797 = vunpack.c.l.b16 %v1765
        %v1798 = vunpack.c.l.b16 %v1766
        %v1799 = vpack.c.b16 %v1784, %v1783
        %v1800 = vpack.c.b16 %v1786, %v1785
        %v1801 = vpack.c.b16 %v1788, %v1787
        %v1802 = vpack.c.b16 %v1790, %v1789
        %v1803 = vpack.c.b16 %v1792, %v1791
        %v1804 = vpack.c.b16 %v1794, %v1793
        %v1805 = vpack.c.b16 %v1796, %v1795
        %v1806 = vpack.c.b16 %v1798, %v1797
        %1815 = vmatpush.bf16.msra.mxu0 %v1806
        %1816 = vmatpush.bf16.msra.mxu0 %v1805
        %1817 = vmatpush.bf16.msra.mxu0 %v1804
        %1818 = vmatpush.bf16.msra.mxu0 %v1803
        %1819 = vmatpush.bf16.msra.mxu0 %v1802
        %1820 = vmatpush.bf16.msra.mxu0 %v1801
        %1821 = vmatpush.bf16.msra.mxu0 %v1800
        %1822 = vmatpush.bf16.msra.mxu0 %v1799
        %1823 = vmatmul.bf16.gmra.mxu0 %v1742
        %v1824 = vpop.f32.mrf.mxu0
        %v1825 = vadd.f32 0.0, %v1824
        %v1826 = vpop.f32.mrf.mxu0
        %v1827 = vadd.f32 0.0, %v1826
        %1828 = vmatmul.bf16.gmra.mxu0 %v1743
        %v1829 = vpop.f32.mrf.mxu0
        %v1830 = vadd.f32 0.0, %v1829
        %v1831 = vpop.f32.mrf.mxu0
        %v1832 = vadd.f32 0.0, %v1831
        %1833 = vmatmul.bf16.gmra.mxu0 %v1744
        %v1834 = vpop.f32.mrf.mxu0
        %v1835 = vadd.f32 0.0, %v1834
        %v1836 = vpop.f32.mrf.mxu0
        %v1837 = vadd.f32 0.0, %v1836
        %1838 = vmatmul.bf16.gmra.mxu0 %v1745
        %v1839 = vpop.f32.mrf.mxu0
        %v1840 = vadd.f32 0.0, %v1839
        %v1841 = vpop.f32.mrf.mxu0
        %v1842 = vadd.f32 0.0, %v1841
        %1843 = vmatmul.bf16.gmra.mxu0 %v1746
        %v1844 = vpop.f32.mrf.mxu0
        %v1845 = vadd.f32 0.0, %v1844
        %v1846 = vpop.f32.mrf.mxu0
        %v1847 = vadd.f32 0.0, %v1846
        %1848 = vmatmul.bf16.gmra.mxu0 %v1747
        %v1849 = vpop.f32.mrf.mxu0
        %v1850 = vadd.f32 0.0, %v1849
        %v1851 = vpop.f32.mrf.mxu0
        %v1852 = vadd.f32 0.0, %v1851
        %1853 = vmatmul.bf16.gmra.mxu0 %v1748
        %v1854 = vpop.f32.mrf.mxu0
        %v1855 = vadd.f32 0.0, %v1854
        %v1856 = vpop.f32.mrf.mxu0
        %v1857 = vadd.f32 0.0, %v1856
        %1858 = vmatmul.bf16.gmra.mxu0 %v1749
        %v1859 = vpop.f32.mrf.mxu0
        %v1860 = vadd.f32 0.0, %v1859
        %v1861 = vpop.f32.mrf.mxu0
        %v1862 = vadd.f32 0.0, %v1861
        %1863 = vdwg.mxu0
        %v1864 = vmul.f32 %v1825, 0.01
        %v1865 = vmul.f32 %v1827, 0.01
        %v1866 = vmul.f32 %v1830, 0.01
        %v1867 = vmul.f32 %v1832, 0.01
        %v1868 = vmul.f32 %v1835, 0.01
        %v1869 = vmul.f32 %v1837, 0.01
        %v1870 = vmul.f32 %v1840, 0.01
        %v1871 = vmul.f32 %v1842, 0.01
        %v1872 = vmul.f32 %v1845, 0.01
        %v1873 = vmul.f32 %v1847, 0.01
        %v1874 = vmul.f32 %v1850, 0.01
        %v1875 = vmul.f32 %v1852, 0.01
        %v1876 = vmul.f32 %v1855, 0.01
        %v1877 = vmul.f32 %v1857, 0.01
        %v1878 = vmul.f32 %v1860, 0.01
        %v1879 = vmul.f32 %v1862, 0.01
        %v1880 = vmax.f32 %v1825, %v1864
        %v1881 = vmax.f32 %v1827, %v1865
        %v1882 = vmax.f32 %v1830, %v1866
        %v1883 = vmax.f32 %v1832, %v1867
        %v1884 = vmax.f32 %v1835, %v1868
        %v1885 = vmax.f32 %v1837, %v1869
        %v1886 = vmax.f32 %v1840, %v1870
        %v1887 = vmax.f32 %v1842, %v1871
        %v1888 = vmax.f32 %v1845, %v1872
        %v1889 = vmax.f32 %v1847, %v1873
        %v1890 = vmax.f32 %v1850, %v1874
        %v1891 = vmax.f32 %v1852, %v1875
        %v1892 = vmax.f32 %v1855, %v1876
        %v1893 = vmax.f32 %v1857, %v1877
        %v1894 = vmax.f32 %v1860, %v1878
        %v1895 = vmax.f32 %v1862, %v1879
        %v1896 = vpack.c.bf16 %v1881, %v1880
        %v1897 = vpack.c.bf16 %v1883, %v1882
        %v1898 = vpack.c.bf16 %v1885, %v1884
        %v1899 = vpack.c.bf16 %v1887, %v1886
        %v1900 = vpack.c.bf16 %v1889, %v1888
        %v1901 = vpack.c.bf16 %v1891, %v1890
        %v1902 = vpack.c.bf16 %v1893, %v1892
        %v1903 = vpack.c.bf16 %v1895, %v1894
        %s1904 = scalar_lea.vmem [#allocation2], 640
        %v1905 = vld [vmem:[%s1904] sm:$0xf]
        %v1906 = vld [vmem:[%s1904 + $0x4] sm:$0xf]
        %v1907 = vld [vmem:[%s1904 + $0x8] sm:$0xf]
        %v1908 = vld [vmem:[%s1904 + $0xc] sm:$0xf]
        %v1909 = vld [vmem:[%s1904 + $0x10] sm:$0xf]
        %v1910 = vld [vmem:[%s1904 + $0x14] sm:$0xf]
        %v1911 = vld [vmem:[%s1904 + $0x18] sm:$0xf]
        %v1912 = vld [vmem:[%s1904 + $0x1c] sm:$0xf]
        %v1913 = vld [vmem:[%s1904 + $0x20] sm:$0xf]
        %v1914 = vld [vmem:[%s1904 + $0x24] sm:$0xf]
        %v1915 = vld [vmem:[%s1904 + $0x28] sm:$0xf]
        %v1916 = vld [vmem:[%s1904 + $0x2c] sm:$0xf]
        %v1917 = vld [vmem:[%s1904 + $0x30] sm:$0xf]
        %v1918 = vld [vmem:[%s1904 + $0x34] sm:$0xf]
        %v1919 = vld [vmem:[%s1904 + $0x38] sm:$0xf]
        %v1920 = vld [vmem:[%s1904 + $0x3c] sm:$0xf]
        %v1937 = vunpack.c.l.b16 %v1905
        %v1938 = vunpack.c.l.b16 %v1906
        %v1939 = vunpack.c.l.b16 %v1907
        %v1940 = vunpack.c.l.b16 %v1908
        %v1941 = vunpack.c.l.b16 %v1909
        %v1942 = vunpack.c.l.b16 %v1910
        %v1943 = vunpack.c.l.b16 %v1911
        %v1944 = vunpack.c.l.b16 %v1912
        %v1945 = vunpack.c.l.b16 %v1913
        %v1946 = vunpack.c.l.b16 %v1914
        %v1947 = vunpack.c.l.b16 %v1915
        %v1948 = vunpack.c.l.b16 %v1916
        %v1949 = vunpack.c.l.b16 %v1917
        %v1950 = vunpack.c.l.b16 %v1918
        %v1951 = vunpack.c.l.b16 %v1919
        %v1952 = vunpack.c.l.b16 %v1920
        %v1953 = vpack.c.b16 %v1938, %v1937
        %v1954 = vpack.c.b16 %v1940, %v1939
        %v1955 = vpack.c.b16 %v1942, %v1941
        %v1956 = vpack.c.b16 %v1944, %v1943
        %v1957 = vpack.c.b16 %v1946, %v1945
        %v1958 = vpack.c.b16 %v1948, %v1947
        %v1959 = vpack.c.b16 %v1950, %v1949
        %v1960 = vpack.c.b16 %v1952, %v1951
        %1969 = vmatpush.bf16.msra.mxu0 %v1960
        %1970 = vmatpush.bf16.msra.mxu0 %v1959
        %1971 = vmatpush.bf16.msra.mxu0 %v1958
        %1972 = vmatpush.bf16.msra.mxu0 %v1957
        %1973 = vmatpush.bf16.msra.mxu0 %v1956
        %1974 = vmatpush.bf16.msra.mxu0 %v1955
        %1975 = vmatpush.bf16.msra.mxu0 %v1954
        %1976 = vmatpush.bf16.msra.mxu0 %v1953
        %1977 = vmatmul.bf16.gmra.mxu0 %v1896
        %v1978 = vpop.f32.mrf.mxu0
        %v1979 = vadd.f32 0.0, %v1978
        %v1980 = vpop.f32.mrf.mxu0
        %v1981 = vadd.f32 0.0, %v1980
        %1982 = vmatmul.bf16.gmra.mxu0 %v1897
        %v1983 = vpop.f32.mrf.mxu0
        %v1984 = vadd.f32 0.0, %v1983
        %v1985 = vpop.f32.mrf.mxu0
        %v1986 = vadd.f32 0.0, %v1985
        %1987 = vmatmul.bf16.gmra.mxu0 %v1898
        %v1988 = vpop.f32.mrf.mxu0
        %v1989 = vadd.f32 0.0, %v1988
        %v1990 = vpop.f32.mrf.mxu0
        %v1991 = vadd.f32 0.0, %v1990
        %1992 = vmatmul.bf16.gmra.mxu0 %v1899
        %v1993 = vpop.f32.mrf.mxu0
        %v1994 = vadd.f32 0.0, %v1993
        %v1995 = vpop.f32.mrf.mxu0
        %v1996 = vadd.f32 0.0, %v1995
        %1997 = vmatmul.bf16.gmra.mxu0 %v1900
        %v1998 = vpop.f32.mrf.mxu0
        %v1999 = vadd.f32 0.0, %v1998
        %v2000 = vpop.f32.mrf.mxu0
        %v2001 = vadd.f32 0.0, %v2000
        %2002 = vmatmul.bf16.gmra.mxu0 %v1901
        %v2003 = vpop.f32.mrf.mxu0
        %v2004 = vadd.f32 0.0, %v2003
        %v2005 = vpop.f32.mrf.mxu0
        %v2006 = vadd.f32 0.0, %v2005
        %2007 = vmatmul.bf16.gmra.mxu0 %v1902
        %v2008 = vpop.f32.mrf.mxu0
        %v2009 = vadd.f32 0.0, %v2008
        %v2010 = vpop.f32.mrf.mxu0
        %v2011 = vadd.f32 0.0, %v2010
        %2012 = vmatmul.bf16.gmra.mxu0 %v1903
        %v2013 = vpop.f32.mrf.mxu0
        %v2014 = vadd.f32 0.0, %v2013
        %v2015 = vpop.f32.mrf.mxu0
        %v2016 = vadd.f32 0.0, %v2015
        %2017 = vdwg.mxu0
        %v2018 = vmul.f32 %v1979, 0.01
        %v2019 = vmul.f32 %v1981, 0.01
        %v2020 = vmul.f32 %v1984, 0.01
        %v2021 = vmul.f32 %v1986, 0.01
        %v2022 = vmul.f32 %v1989, 0.01
        %v2023 = vmul.f32 %v1991, 0.01
        %v2024 = vmul.f32 %v1994, 0.01
        %v2025 = vmul.f32 %v1996, 0.01
        %v2026 = vmul.f32 %v1999, 0.01
        %v2027 = vmul.f32 %v2001, 0.01
        %v2028 = vmul.f32 %v2004, 0.01
        %v2029 = vmul.f32 %v2006, 0.01
        %v2030 = vmul.f32 %v2009, 0.01
        %v2031 = vmul.f32 %v2011, 0.01
        %v2032 = vmul.f32 %v2014, 0.01
        %v2033 = vmul.f32 %v2016, 0.01
        %v2034 = vmax.f32 %v1979, %v2018
        %v2035 = vmax.f32 %v1981, %v2019
        %v2036 = vmax.f32 %v1984, %v2020
        %v2037 = vmax.f32 %v1986, %v2021
        %v2038 = vmax.f32 %v1989, %v2022
        %v2039 = vmax.f32 %v1991, %v2023
        %v2040 = vmax.f32 %v1994, %v2024
        %v2041 = vmax.f32 %v1996, %v2025
        %v2042 = vmax.f32 %v1999, %v2026
        %v2043 = vmax.f32 %v2001, %v2027
        %v2044 = vmax.f32 %v2004, %v2028
        %v2045 = vmax.f32 %v2006, %v2029
        %v2046 = vmax.f32 %v2009, %v2030
        %v2047 = vmax.f32 %v2011, %v2031
        %v2048 = vmax.f32 %v2014, %v2032
        %v2049 = vmax.f32 %v2016, %v2033
        %v2050 = vpack.c.bf16 %v2035, %v2034
        %v2051 = vpack.c.bf16 %v2037, %v2036
        %v2052 = vpack.c.bf16 %v2039, %v2038
        %v2053 = vpack.c.bf16 %v2041, %v2040
        %v2054 = vpack.c.bf16 %v2043, %v2042
        %v2055 = vpack.c.bf16 %v2045, %v2044
        %v2056 = vpack.c.bf16 %v2047, %v2046
        %v2057 = vpack.c.bf16 %v2049, %v2048
        %v2058 = vld [vmem:[%s3] sm:$0xf]
        %v2059 = vld [vmem:[%s3 + $0x4] sm:$0xf]
        %v2060 = vld [vmem:[%s3 + $0x8] sm:$0xf]
        %v2061 = vld [vmem:[%s3 + $0xc] sm:$0xf]
        %v2062 = vld [vmem:[%s3 + $0x10] sm:$0xf]
        %v2063 = vld [vmem:[%s3 + $0x14] sm:$0xf]
        %v2064 = vld [vmem:[%s3 + $0x18] sm:$0xf]
        %v2065 = vld [vmem:[%s3 + $0x1c] sm:$0xf]
        %v2066 = vld [vmem:[%s3 + $0x20] sm:$0xf]
        %v2067 = vld [vmem:[%s3 + $0x24] sm:$0xf]
        %v2068 = vld [vmem:[%s3 + $0x28] sm:$0xf]
        %v2069 = vld [vmem:[%s3 + $0x2c] sm:$0xf]
        %v2070 = vld [vmem:[%s3 + $0x30] sm:$0xf]
        %v2071 = vld [vmem:[%s3 + $0x34] sm:$0xf]
        %v2072 = vld [vmem:[%s3 + $0x38] sm:$0xf]
        %v2073 = vld [vmem:[%s3 + $0x3c] sm:$0xf]
        %v2090 = vunpack.c.l.b16 %v2058
        %v2091 = vunpack.c.l.b16 %v2059
        %v2092 = vunpack.c.l.b16 %v2060
        %v2093 = vunpack.c.l.b16 %v2061
        %v2094 = vunpack.c.l.b16 %v2062
        %v2095 = vunpack.c.l.b16 %v2063
        %v2096 = vunpack.c.l.b16 %v2064
        %v2097 = vunpack.c.l.b16 %v2065
        %v2098 = vunpack.c.l.b16 %v2066
        %v2099 = vunpack.c.l.b16 %v2067
        %v2100 = vunpack.c.l.b16 %v2068
        %v2101 = vunpack.c.l.b16 %v2069
        %v2102 = vunpack.c.l.b16 %v2070
        %v2103 = vunpack.c.l.b16 %v2071
        %v2104 = vunpack.c.l.b16 %v2072
        %v2105 = vunpack.c.l.b16 %v2073
        %v2106 = vpack.c.b16 %v2091, %v2090
        %v2107 = vpack.c.b16 %v2093, %v2092
        %v2108 = vpack.c.b16 %v2095, %v2094
        %v2109 = vpack.c.b16 %v2097, %v2096
        %v2110 = vpack.c.b16 %v2099, %v2098
        %v2111 = vpack.c.b16 %v2101, %v2100
        %v2112 = vpack.c.b16 %v2103, %v2102
        %v2113 = vpack.c.b16 %v2105, %v2104
        %2122 = vmatpush.bf16.msra.mxu0 %v2113
        %2123 = vmatpush.bf16.msra.mxu0 %v2112
        %2124 = vmatpush.bf16.msra.mxu0 %v2111
        %2125 = vmatpush.bf16.msra.mxu0 %v2110
        %2126 = vmatpush.bf16.msra.mxu0 %v2109
        %2127 = vmatpush.bf16.msra.mxu0 %v2108
        %2128 = vmatpush.bf16.msra.mxu0 %v2107
        %2129 = vmatpush.bf16.msra.mxu0 %v2106
        %2130 = vmatmul.bf16.gmra.mxu0 %v2050
        %v2131 = vpop.f32.mrf.mxu0
        %v2132 = vadd.f32 0.0, %v2131
        %v2133 = vpop.f32.mrf.mxu0
        %v2134 = vadd.f32 0.0, %v2133
        %2135 = vmatmul.bf16.gmra.mxu0 %v2051
        %v2136 = vpop.f32.mrf.mxu0
        %v2137 = vadd.f32 0.0, %v2136
        %v2138 = vpop.f32.mrf.mxu0
        %v2139 = vadd.f32 0.0, %v2138
        %2140 = vmatmul.bf16.gmra.mxu0 %v2052
        %v2141 = vpop.f32.mrf.mxu0
        %v2142 = vadd.f32 0.0, %v2141
        %v2143 = vpop.f32.mrf.mxu0
        %v2144 = vadd.f32 0.0, %v2143
        %2145 = vmatmul.bf16.gmra.mxu0 %v2053
        %v2146 = vpop.f32.mrf.mxu0
        %v2147 = vadd.f32 0.0, %v2146
        %v2148 = vpop.f32.mrf.mxu0
        %v2149 = vadd.f32 0.0, %v2148
        %2150 = vmatmul.bf16.gmra.mxu0 %v2054
        %v2151 = vpop.f32.mrf.mxu0
        %v2152 = vadd.f32 0.0, %v2151
        %v2153 = vpop.f32.mrf.mxu0
        %v2154 = vadd.f32 0.0, %v2153
        %2155 = vmatmul.bf16.gmra.mxu0 %v2055
        %v2156 = vpop.f32.mrf.mxu0
        %v2157 = vadd.f32 0.0, %v2156
        %v2158 = vpop.f32.mrf.mxu0
        %v2159 = vadd.f32 0.0, %v2158
        %2160 = vmatmul.bf16.gmra.mxu0 %v2056
        %v2161 = vpop.f32.mrf.mxu0
        %v2162 = vadd.f32 0.0, %v2161
        %v2163 = vpop.f32.mrf.mxu0
        %v2164 = vadd.f32 0.0, %v2163
        %2165 = vmatmul.bf16.gmra.mxu0 %v2057
        %v2166 = vpop.f32.mrf.mxu0
        %v2167 = vadd.f32 0.0, %v2166
        %v2168 = vpop.f32.mrf.mxu0
        %v2169 = vadd.f32 0.0, %v2168
        %2170 = vdwg.mxu0
        %vm2171 = vcmask 64512
        %2172 = vst.msk [vmem:[%s216] sm:$0xff] %vm2171, %v2132
        %2173 = vst.msk [vmem:[%s216 + $0x8] sm:$0xff] %vm2171, %v2134
        %2174 = vst.msk [vmem:[%s216 + $0x10] sm:$0xff] %vm2171, %v2137
        %2175 = vst.msk [vmem:[%s216 + $0x18] sm:$0xff] %vm2171, %v2139
        %2176 = vst.msk [vmem:[%s216 + $0x20] sm:$0xff] %vm2171, %v2142
        %2177 = vst.msk [vmem:[%s216 + $0x28] sm:$0xff] %vm2171, %v2144
        %2178 = vst.msk [vmem:[%s216 + $0x30] sm:$0xff] %vm2171, %v2147
        %2179 = vst.msk [vmem:[%s216 + $0x38] sm:$0xff] %vm2171, %v2149
        %2180 = vst.msk [vmem:[%s216 + $0x40] sm:$0xff] %vm2171, %v2152
        %2181 = vst.msk [vmem:[%s216 + $0x48] sm:$0xff] %vm2171, %v2154
        %2182 = vst.msk [vmem:[%s216 + $0x50] sm:$0xff] %vm2171, %v2157
        %2183 = vst.msk [vmem:[%s216 + $0x58] sm:$0xff] %vm2171, %v2159
        %2184 = vst.msk [vmem:[%s216 + $0x60] sm:$0xff] %vm2171, %v2162
        %2185 = vst.msk [vmem:[%s216 + $0x68] sm:$0xff] %vm2171, %v2164
        %2186 = vst.msk [vmem:[%s216 + $0x70] sm:$0xff] %vm2171, %v2167
        %2187 = vst.msk [vmem:[%s216 + $0x78] sm:$0xff] %vm2171, %v2169
        %s2188 = smul.u32 16, %s16
        %p2189 = scmp.lt.s32.totalorder %s2188, 31
        %s2190 = scalar_select %p2189, %s2188, 31
        %s2191 = smul.addr %s2190, 8
        %s2192 = scalar_lea.vmem %s4, %s2191
        // Predicated region
        $region41: #{tpu_custom_call.1} parent=35 // pred_check
          %p2193 = pneg %p123
        $region42: #{tpu_custom_call.1} parent=35 // pred_check_branch
          %2195 = sbr.rel (%p2193) target = $region44
        $region43: #{tpu_custom_call.1} parent=35 // pred_region
          %s2196 = smul.u32 16, %s16
        $region44: #{tpu_custom_call.1} parent=35 // pred_fallthru
          _
      $region36: #{tpu_custom_call.1} parent=5 // pred_fallthru
        _
      %p2197 = scmp.le.s32.totalorder 2, %s11
      // Predicated region
      $region45: #{tpu_custom_call.1} parent=5 // pred_check
        %p2198 = pneg %p2197
      $region46: #{tpu_custom_call.1} parent=5 // pred_check_branch
        %2200 = sbr.rel (%p2198) target = $region48
      $region47: #{tpu_custom_call.1} parent=5 // pred_region
        %s2201 = ssub.s32 %s11, 2
        // Predicated region
        $region49: #{tpu_custom_call.1} parent=47 // pred_check
          %p2202 = pneg %p129
        $region50: #{tpu_custom_call.1} parent=47 // pred_check_branch
          %2204 = sbr.rel (%p2202) target = $region52
        $region51: #{tpu_custom_call.1} parent=47 // pred_region
          %s2205 = smul.u32 16, %s17
          %p2206 = scmp.lt.s32.totalorder %s2205, 31
          %s2207 = scalar_select %p2206, %s2205, 31
          %s2208 = smul.addr %s2207, 8
          %s2209 = scalar_lea.vmem %s4, %s2208
        $region52: #{tpu_custom_call.1} parent=47 // pred_fallthru
          _
      $region48: #{tpu_custom_call.1} parent=5 // pred_fallthru
        _
    $region6: #{tpu_custom_call.1} parent=1 // loop_footer
      %s15 = sadd.s32 1, %s11
    $region7: #{tpu_custom_call.1} parent=1 // loop_footer_branch
      %10 = sbr.rel target = $region3
    $region8: #{tpu_custom_call.1} parent=1 // loop_exit
      _
    %2210 = vsyncpa [#allocation3], 1
    %s2211 = scalar_lea.sflag [#allocation3], 1
    %2212 = vsyncpa %s2211, 1

</llo_original>
